<compile_context>
chip_gen: v5e
topology: v5e:2x2
jax: 0.10.0
libtpu: 0.0.40
codegen_flags: <defaults>
</compile_context>

<pallas_src>
import numpy as np
import jax
import jax.numpy as jnp
from jax.experimental import pallas as pl
from jax.experimental.pallas import tpu as pltpu

# ----------------------------- model constants ------------------------------
NUM_JOINTS = 24
NUM_BETAS = 10
NUM_POSE_FEATS = 207                          # 23 joints * 9 rotmat entries
NUM_FEATS = 1 + NUM_BETAS + NUM_POSE_FEATS    # 218 (const-1 | betas | pose feats)
NUM_FEATS_PAD = 224                           # 218 -> multiple of 16 (bf16 sublanes)
NUM_JOINTS_PAD = 32                           # 24 joints + 1 transl pseudo-joint -> 32
NUM_XFORM = 12                                # top 3x4 of each blended 4x4
NUM_VERTS = 384                               # synthetic (real SMPL: 6890)
NUM_H36M = 17

# All verts fit one tile here.  Real SMPL (V=6890): V_TILE <= ~4096 bf16 on v7x
# (64 MiB VMEM, 2 TCs -> want nt >= 2), ~4096 on v6e with vmem_limit_bytes
# raised past the 32 MiB scoped default, ~1024-2048 on v5e (16 MiB default).
V_TILE = NUM_VERTS

# Max batch-tile for the matmul M dimension. v5e MXU has 128 rows; v6e/v7x can
# raise this to 256 for large batches.
MAX_B_TILE = 128

assert V_TILE % 128 == 0 and NUM_VERTS % V_TILE == 0
assert NUM_FEATS_PAD % 16 == 0 and NUM_FEATS_PAD >= NUM_FEATS

# standard SMPL kinematic tree
PARENTS = np.array(
    [-1, 0, 0, 0, 1, 2, 3, 4, 5, 6, 7, 8, 9, 9, 9, 12, 13, 14, 16, 17, 18, 19,
     20, 21], dtype=np.int32)


def _tree_levels(parents):
    depth = np.zeros(len(parents), dtype=np.int64)
    for i in range(1, len(parents)):
        depth[i] = depth[parents[i]] + 1
    return [np.nonzero(depth == d)[0] for d in range(1, int(depth.max()) + 1)]


LEVELS = _tree_levels(PARENTS)    # 8 levels below the root


def _round_up(x, m):
    return ((x + m - 1) // m) * m


# ----------------------------- Pallas kernel --------------------------------
def lbs_kernel(feats_ref, arel_ref, basis_ref, w_ref, verts_ref):
    """Per (vertex-tile, batch-group) LBS; vertices on the lane axis, batch on
    the sublane axis.

    feats_ref : (B_TILE, 224)            bf16  [1 | betas | (R-I) pose feats | 0]
    arel_ref  : (1, 12*B_TILE, 32)       bf16  blended-transform rows, entry-major
                                               (row k*B_TILE + b = entry k, batch b;
                                                joint 24 = translation pseudo-joint)
    basis_ref : (224, 3*V_TILE)          bf16  fused [x|y|z] blendshape basis
    w_ref     : (32, V_TILE)             bf16  skinning weights^T (+ all-ones row 24)
    verts_ref : (3, B_TILE, V_TILE)      f32   output, coordinate-major
    """
    bt = feats_ref.shape[0]
    vt = w_ref.shape[1]

    # Fused blendshape matmul (template + shape + pose, all 3 coords): one MXU
    # pass, bf16 inputs, f32 accumulation.
    P = jnp.dot(feats_ref[...], basis_ref[...],
                preferred_element_type=jnp.float32)          # (bt, 3*vt)
    px = P[:, 0:vt]                                          # lane slices @128-mult
    py = P[:, vt:2 * vt]
    pz = P[:, 2 * vt:3 * vt]

    # Per-vertex skinning transforms (translation already folded in via the
    # 25th pseudo-joint):  (12*bt, 32) @ (32, vt) -> (12*bt, vt).
    T = jnp.dot(arel_ref[0], w_ref[...],
                preferred_element_type=jnp.float32)          # (12*bt, vt)

    def row(k):                                              # (bt, vt) sublane slab
        return T[k * bt:(k + 1) * bt, :]

    ox = row(0) * px + row(1) * py + row(2) * pz + row(3)
    oy = row(4) * px + row(5) * py + row(6) * pz + row(7)
    oz = row(8) * px + row(9) * py + row(10) * pz + row(11)

    # Dense (bt, vt) slab stores — full-sublane, unmasked vst.
    verts_ref[0, :, :] = ox.astype(verts_ref.dtype)
    verts_ref[1, :, :] = oy.astype(verts_ref.dtype)
    verts_ref[2, :, :] = oz.astype(verts_ref.dtype)


def lbs_pallas(feats, arel, basis, weights_t, b_tile):
    """feats (B_pad, 224) bf16, arel (nb, 12*b_tile, 32) bf16,
    basis (224, 3*V) bf16, weights_t (32, V) bf16  ->  verts (3, B_pad, V) f32."""
    B_pad = feats.shape[0]
    nt = NUM_VERTS // V_TILE
    nb = B_pad // b_tile
    grid = (nt, nb)   # vertex tiles outermost (parallel split), batch groups inner
    return pl.pallas_call(
        lbs_kernel,
        out_shape=jax.ShapeDtypeStruct((3, B_pad, NUM_VERTS), jnp.float32),
        grid_spec=pltpu.PrefetchScalarGridSpec(
            num_scalar_prefetch=0,
            grid=grid,
            in_specs=[
                pl.BlockSpec((b_tile, NUM_FEATS_PAD), lambda v, b: (b, 0)),
                pl.BlockSpec((1, NUM_XFORM * b_tile, NUM_JOINTS_PAD),
                             lambda v, b: (b, 0, 0)),
                pl.BlockSpec((NUM_FEATS_PAD, 3 * V_TILE), lambda v, b: (0, v)),
                pl.BlockSpec((NUM_JOINTS_PAD, V_TILE), lambda v, b: (0, v)),
            ],
            out_specs=pl.BlockSpec((3, b_tile, V_TILE), lambda v, b: (0, b, v)),
        ),
        compiler_params=pltpu.CompilerParams(
            # vertex axis "parallel": on v7x the 2 TCs stream disjoint basis halves.
            # batch axis "arbitrary": basis/weights blocks stay resident across it.
            dimension_semantics=("parallel", "arbitrary")),
    )(feats, arel, basis, weights_t)


# ------------------------------ JAX glue ------------------------------------
def rodrigues(rvec):
    """Axis-angle (..., 3) -> rotation matrices (..., 3, 3)."""
    angle = jnp.sqrt(jnp.sum(rvec * rvec, axis=-1, keepdims=True) + 1e-16)
    axis = rvec / angle
    cos = jnp.cos(angle)[..., None]
    sin = jnp.sin(angle)[..., None]
    rx, ry, rz = axis[..., 0], axis[..., 1], axis[..., 2]
    zeros = jnp.zeros_like(rx)
    K = jnp.stack([zeros, -rz, ry, rz, zeros, -rx, -ry, rx, zeros], axis=-1)
    K = K.reshape(rvec.shape[:-1] + (3, 3))
    eye = jnp.eye(3, dtype=rvec.dtype)
    return eye + sin * K + (1.0 - cos) * jnp.matmul(K, K)


def rigid_transform(rot_mats, joints, parents):
    """Kinematic chain: (B,24,3,3), (B,24,3) -> posed joints, relative 4x4 xforms.

    The chain is processed level-by-level (8 batched 4x4 matmuls) instead of 23
    sequential per-joint matmuls — this loop is the true critical path at small B.
    """
    B = joints.shape[0]
    dtype = joints.dtype
    rel_joints = joints - jnp.concatenate(
        [jnp.zeros((B, 1, 3), dtype), joints[:, parents[1:]]], axis=1)
    tmat = jnp.concatenate([rot_mats, rel_joints[..., None]], axis=-1)      # (B,24,3,4)
    bottom = jnp.broadcast_to(jnp.array([0., 0., 0., 1.], dtype),
                              (B, NUM_JOINTS, 1, 4))
    tmat = jnp.concatenate([tmat, bottom], axis=-2)                          # (B,24,4,4)

    A = [None] * NUM_JOINTS
    A[0] = tmat[:, 0]
    for idxs in LEVELS:
        A_par = jnp.stack([A[int(parents[int(j)])] for j in idxs], axis=1)   # (B,n,4,4)
        A_new = jnp.matmul(A_par, tmat[:, idxs])                             # (B,n,4,4)
        for i, j in enumerate(idxs):
            A[int(j)] = A_new[:, i]
    A = jnp.stack(A, axis=1)                                                 # (B,24,4,4)

    posed_joints = A[:, :, :3, 3]
    t_rel = A[:, :, :3, 3] - jnp.einsum('bjkl,bjl->bjk', A[:, :, :3, :3], joints)
    A_rel = A.at[:, :, :3, 3].set(t_rel)
    return posed_joints, A_rel


def make_params(key):
    """Deterministic synthetic SMPL parameters (no file loading)."""
    k = jax.random.split(key, 6)
    v_template = jax.random.normal(k[0], (NUM_VERTS, 3), jnp.float32) * 0.5
    shapedirs = jax.random.normal(k[1], (NUM_VERTS, 3, NUM_BETAS), jnp.float32) * 0.03
    posedirs = jax.random.normal(k[2], (NUM_VERTS, 3, NUM_POSE_FEATS), jnp.float32) * 0.01
    lbs_weights = jax.nn.softmax(
        2.0 * jax.random.normal(k[3], (NUM_VERTS, NUM_JOINTS), jnp.float32), axis=-1)
    j_regressor = jax.nn.softmax(
        jax.random.normal(k[4], (NUM_JOINTS, NUM_VERTS), jnp.float32), axis=-1)
    j_regressor_h36m = jax.nn.softmax(
        jax.random.normal(k[5], (NUM_H36M, NUM_VERTS), jnp.float32), axis=-1)

    # Joint regressor composed with the shape blendshapes:
    #   J(betas) = Jreg @ (v_template + shapedirs @ betas)
    J_template = j_regressor @ v_template                                    # (24,3)
    J_shapedirs = jnp.einsum('jv,vcs->jcs', j_regressor, shapedirs)          # (24,3,10)

    # Fused, lane-dense blendshape basis: features (padded 218->224) on sublanes,
    # columns laid out per vertex tile as [x_tile | y_tile | z_tile].  Stored bf16.
    nt = NUM_VERTS // V_TILE
    basis_c = [jnp.concatenate(
        [v_template[:, c:c + 1], shapedirs[:, c, :], posedirs[:, c, :]], axis=1)
        for c in range(3)]                                                   # 3 x (V,218)
    b3 = jnp.stack(basis_c, axis=0)                                          # (3,V,218)
    b3 = b3.reshape(3, nt, V_TILE, NUM_FEATS)
    b3 = jnp.transpose(b3, (3, 1, 0, 2)).reshape(NUM_FEATS, nt * 3 * V_TILE)
    basis = jnp.zeros((NUM_FEATS_PAD, 3 * NUM_VERTS), jnp.float32)
    basis = basis.at[:NUM_FEATS, :].set(b3)
    basis_fused = basis.astype(jnp.bfloat16)                                 # (224, 3V)

    # Skinning weights^T with a 25th pseudo-joint (all ones) that carries the
    # global translation through the skinning matmul.  Padded 25 -> 32, bf16.
    w = jnp.zeros((NUM_JOINTS_PAD, NUM_VERTS), jnp.float32)
    w = w.at[:NUM_JOINTS, :].set(jnp.transpose(lbs_weights))
    w = w.at[NUM_JOINTS, :].set(1.0)
    weights_t = w.astype(jnp.bfloat16)                                       # (32, V)

    return dict(v_template=v_template, shapedirs=shapedirs, posedirs=posedirs,
                lbs_weights=lbs_weights, j_regressor=j_regressor,
                j_regressor_h36m=j_regressor_h36m,
                J_template=J_template, J_shapedirs=J_shapedirs,
                basis_fused=basis_fused, weights_t=weights_t)


def pysmpl_forward(params, _betas, _pose, _transl=None):
    """Equivalent of PySMPL.forward: betas (..,10), pose (..,24,3) axis-angle."""
    betas = _betas.reshape(-1, NUM_BETAS).astype(jnp.float32)
    pose = _pose.reshape(-1, NUM_JOINTS, 3).astype(jnp.float32)
    B = betas.shape[0]
    if _transl is not None:
        transl = _transl.reshape(-1, 3).astype(jnp.float32)
    else:
        transl = jnp.zeros((B, 3), jnp.float32)

    # global_pose = pose[:, :1], local_pose = pose[:, 1:]; the SMPL layer
    # re-concatenates them, so operating on the full 24-joint pose is equivalent.
    rot_mats = rodrigues(pose)                                               # (B,24,3,3)
    pose_feats = (rot_mats[:, 1:] - jnp.eye(3, dtype=jnp.float32)
                  ).reshape(B, NUM_POSE_FEATS)                               # (B,207)

    J = params['J_template'][None] + jnp.einsum(
        'jcs,bs->bjc', params['J_shapedirs'], betas)                         # (B,24,3)
    posed_joints, A_rel = rigid_transform(rot_mats, J, PARENTS)

    # ---- pack kernel operands (batch padded to a B_TILE multiple) ----------
    b_tile = min(MAX_B_TILE, _round_up(B, 16))        # 16 = bf16 sublane pack
    B_pad = _round_up(B, b_tile)
    nb = B_pad // b_tile

    feats = jnp.concatenate(
        [jnp.ones((B, 1), jnp.float32), betas, pose_feats], axis=1)          # (B,218)
    feats_p = jnp.zeros((B_pad, NUM_FEATS_PAD), jnp.float32)
    feats_p = feats_p.at[:B, :NUM_FEATS].set(feats)
    feats_bf = feats_p.astype(jnp.bfloat16)                                  # (B_pad,224)

    # Top 3x4 of each relative transform, flattened row-major (12 entries),
    # plus a 25th pseudo-joint carrying the translation, padded to 32 joints.
    A12 = A_rel[:, :, :3, :].reshape(B, NUM_JOINTS, NUM_XFORM)               # (B,24,12)
    t12 = jnp.zeros((B, 1, NUM_XFORM), jnp.float32)
    t12 = (t12.at[:, 0, 3].set(transl[:, 0])
              .at[:, 0, 7].set(transl[:, 1])
              .at[:, 0, 11].set(transl[:, 2]))
    A_ext = jnp.concatenate([A12, t12], axis=1)                              # (B,25,12)
    A_ext = jnp.pad(A_ext, ((0, B_pad - B),
                            (0, NUM_JOINTS_PAD - (NUM_JOINTS + 1)), (0, 0))) # (B_pad,32,12)
    # Entry-major within each batch group: row k*b_tile + b holds entry k of batch b.
    arel = jnp.transpose(A_ext.reshape(nb, b_tile, NUM_JOINTS_PAD, NUM_XFORM),
                         (0, 3, 1, 2)).reshape(nb, NUM_XFORM * b_tile, NUM_JOINTS_PAD)
    arel_bf = arel.astype(jnp.bfloat16)                                      # (nb,12*bt,32)

    verts_t = lbs_pallas(feats_bf, arel_bf,
                         params['basis_fused'], params['weights_t'], b_tile)  # (3,B_pad,V)
    verts = jnp.transpose(verts_t, (1, 2, 0))[:B]                             # (B,V,3)

    joints24 = posed_joints + transl[:, None, :]
    joints_h36m = jnp.einsum('jv,bvc->bjc', params['j_regressor_h36m'], verts)
    # TODO(synk): hybrik-style twist/phi extraction and leaf-joint extras of the
    # original SMPL_layer output are not reproduced here.
    return {'vertices': verts, 'joints': joints24, 'joints_from_verts': joints_h36m}


def lbs_reference(params, betas, pose_feats, A_rel, transl):
    """Plain-JAX reference of the kernel math, applying the same bf16
    parameter/input quantization (accumulation in f32)."""
    q = lambda x: x.astype(jnp.bfloat16).astype(jnp.float32)
    hi = jax.lax.Precision.HIGHEST
    v_shaped = q(params['v_template'])[None] + jnp.einsum(
        'vcs,bs->bvc', q(params['shapedirs']), q(betas), precision=hi)
    v_posed = v_shaped + jnp.einsum(
        'vcp,bp->bvc', q(params['posedirs']), q(pose_feats), precision=hi)
    T = jnp.einsum('vj,bjkl->bvkl', q(params['lbs_weights']), q(A_rel),
                   precision=hi)                                             # (B,V,4,4)
    verts = jnp.einsum('bvkl,bvl->bvk', T[..., :3, :3], v_posed,
                       precision=hi) + T[..., :3, 3]
    return verts + q(transl)[:, None, :]


# --------------------------------- main --------------------------------------
if __name__ == "__main__":
    key = jax.random.PRNGKey(0)
    pkey, dkey = jax.random.split(key)
    params = make_params(pkey)

    k1, k2, k3 = jax.random.split(dkey, 3)
    B = 2
    betas = jax.random.normal(k1, (B, NUM_BETAS), jnp.float32) * 0.5
    pose = jax.random.normal(k2, (B, NUM_JOINTS, 3), jnp.float32) * 0.3
    transl = jax.random.normal(k3, (B, 3), jnp.float32) * 0.1

    out = pysmpl_forward(params, betas, pose, transl)
    verts = jax.block_until_ready(out['vertices'])

    # correctness check vs a bf16-quantized, f32-accumulated pure-JAX reference
    rot_mats = rodrigues(pose)
    pose_feats = (rot_mats[:, 1:] - jnp.eye(3, dtype=jnp.float32)
                  ).reshape(B, NUM_POSE_FEATS)
    J = params['J_template'][None] + jnp.einsum('jcs,bs->bjc',
                                                params['J_shapedirs'], betas)
    _, A_rel = rigid_transform(rot_mats, J, PARENTS)
    ref_verts = lbs_reference(params, betas, pose_feats, A_rel, transl)
    np.testing.assert_allclose(np.asarray(verts), np.asarray(ref_verts),
                               rtol=5e-4, atol=5e-4)

    assert out['vertices'].shape == (B, NUM_VERTS, 3)
    assert out['joints'].shape == (B, NUM_JOINTS, 3)
    assert out['joints_from_verts'].shape == (B, NUM_H36M, 3)
    print("KERNEL_OK")
</pallas_src>

<mosaic_0001>
module attributes {stable_mosaic.version = 11 : i64} {
  func.func @lbs_kernel(%arg0: i32, %arg1: i32, %arg2: memref<16x224xbf16, #tpu.memory_space<vmem>>, %arg3: memref<1x192x32xbf16, #tpu.memory_space<vmem>>, %arg4: memref<224x1152xbf16, #tpu.memory_space<vmem>>, %arg5: memref<32x384xbf16, #tpu.memory_space<vmem>>, %arg6: memref<3x16x384xf32, #tpu.memory_space<vmem>>) attributes {dimension_semantics = [#tpu.dimension_semantics<parallel>, #tpu.dimension_semantics<arbitrary>], iteration_bounds = array<i64: 1, 1>, scalar_prefetch = 0 : i64, scratch_operands = 0 : i64, tpu.core_type = #tpu.core_type<tc>, window_params = [{transform_indices = @transform_0, window_bounds = array<i64: 16, 224>}, {transform_indices = @transform_1, window_bounds = array<i64: 1, 192, 32>}, {transform_indices = @transform_2, window_bounds = array<i64: 224, 1152>}, {transform_indices = @transform_3, window_bounds = array<i64: 32, 384>}, {transform_indices = @transform_4, window_bounds = array<i64: 3, 16, 384>}]} {
    %c0 = arith.constant 0 : index
    %c0_0 = arith.constant 0 : index
    %0 = vector.load %arg2[%c0, %c0_0] : memref<16x224xbf16, #tpu.memory_space<vmem>>, vector<16x224xbf16>
    %c0_1 = arith.constant 0 : index
    %c0_2 = arith.constant 0 : index
    %1 = vector.load %arg4[%c0_1, %c0_2] : memref<224x1152xbf16, #tpu.memory_space<vmem>>, vector<224x1152xbf16>
    %cst = arith.constant dense<0.000000e+00> : vector<16x1152xf32>
    %2 = tpu.matmul %0, %1, %cst {dimension_numbers = #tpu.dot_dimension_numbers<[1], [0], [0], [1], [0, 0, 1, 1], [], []>} : vector<16x224xbf16>, vector<224x1152xbf16>, vector<16x1152xf32> -> vector<16x1152xf32>
    %3 = vector.extract_strided_slice %2 {offsets = [0, 0], sizes = [16, 384], strides = [1, 1]} : vector<16x1152xf32> to vector<16x384xf32>
    %4 = vector.extract_strided_slice %2 {offsets = [0, 384], sizes = [16, 384], strides = [1, 1]} : vector<16x1152xf32> to vector<16x384xf32>
    %5 = vector.extract_strided_slice %2 {offsets = [0, 768], sizes = [16, 384], strides = [1, 1]} : vector<16x1152xf32> to vector<16x384xf32>
    %c0_3 = arith.constant 0 : index
    %c0_4 = arith.constant 0 : index
    %c0_5 = arith.constant 0 : index
    %6 = vector.load %arg3[%c0_3, %c0_4, %c0_5] : memref<1x192x32xbf16, #tpu.memory_space<vmem>>, vector<1x192x32xbf16>
    %7 = vector.shape_cast %6 : vector<1x192x32xbf16> to vector<192x32xbf16>
    %c0_6 = arith.constant 0 : index
    %c0_7 = arith.constant 0 : index
    %8 = vector.load %arg5[%c0_6, %c0_7] : memref<32x384xbf16, #tpu.memory_space<vmem>>, vector<32x384xbf16>
    %cst_8 = arith.constant dense<0.000000e+00> : vector<192x384xf32>
    %9 = tpu.matmul %7, %8, %cst_8 {dimension_numbers = #tpu.dot_dimension_numbers<[1], [0], [0], [1], [0, 0, 1, 1], [], []>} : vector<192x32xbf16>, vector<32x384xbf16>, vector<192x384xf32> -> vector<192x384xf32>
    %10 = vector.extract_strided_slice %9 {offsets = [0, 0], sizes = [16, 384], strides = [1, 1]} : vector<192x384xf32> to vector<16x384xf32>
    %11 = arith.mulf %10, %3 : vector<16x384xf32>
    %12 = vector.extract_strided_slice %9 {offsets = [16, 0], sizes = [16, 384], strides = [1, 1]} : vector<192x384xf32> to vector<16x384xf32>
    %13 = arith.mulf %12, %4 : vector<16x384xf32>
    %14 = arith.addf %11, %13 : vector<16x384xf32>
    %15 = vector.extract_strided_slice %9 {offsets = [32, 0], sizes = [16, 384], strides = [1, 1]} : vector<192x384xf32> to vector<16x384xf32>
    %16 = arith.mulf %15, %5 : vector<16x384xf32>
    %17 = arith.addf %14, %16 : vector<16x384xf32>
    %18 = vector.extract_strided_slice %9 {offsets = [48, 0], sizes = [16, 384], strides = [1, 1]} : vector<192x384xf32> to vector<16x384xf32>
    %19 = arith.addf %17, %18 : vector<16x384xf32>
    %20 = vector.extract_strided_slice %9 {offsets = [64, 0], sizes = [16, 384], strides = [1, 1]} : vector<192x384xf32> to vector<16x384xf32>
    %21 = arith.mulf %20, %3 : vector<16x384xf32>
    %22 = vector.extract_strided_slice %9 {offsets = [80, 0], sizes = [16, 384], strides = [1, 1]} : vector<192x384xf32> to vector<16x384xf32>
    %23 = arith.mulf %22, %4 : vector<16x384xf32>
    %24 = arith.addf %21, %23 : vector<16x384xf32>
    %25 = vector.extract_strided_slice %9 {offsets = [96, 0], sizes = [16, 384], strides = [1, 1]} : vector<192x384xf32> to vector<16x384xf32>
    %26 = arith.mulf %25, %5 : vector<16x384xf32>
    %27 = arith.addf %24, %26 : vector<16x384xf32>
    %28 = vector.extract_strided_slice %9 {offsets = [112, 0], sizes = [16, 384], strides = [1, 1]} : vector<192x384xf32> to vector<16x384xf32>
    %29 = arith.addf %27, %28 : vector<16x384xf32>
    %30 = vector.extract_strided_slice %9 {offsets = [128, 0], sizes = [16, 384], strides = [1, 1]} : vector<192x384xf32> to vector<16x384xf32>
    %31 = arith.mulf %30, %3 : vector<16x384xf32>
    %32 = vector.extract_strided_slice %9 {offsets = [144, 0], sizes = [16, 384], strides = [1, 1]} : vector<192x384xf32> to vector<16x384xf32>
    %33 = arith.mulf %32, %4 : vector<16x384xf32>
    %34 = arith.addf %31, %33 : vector<16x384xf32>
    %35 = vector.extract_strided_slice %9 {offsets = [160, 0], sizes = [16, 384], strides = [1, 1]} : vector<192x384xf32> to vector<16x384xf32>
    %36 = arith.mulf %35, %5 : vector<16x384xf32>
    %37 = arith.addf %34, %36 : vector<16x384xf32>
    %38 = vector.extract_strided_slice %9 {offsets = [176, 0], sizes = [16, 384], strides = [1, 1]} : vector<192x384xf32> to vector<16x384xf32>
    %39 = arith.addf %37, %38 : vector<16x384xf32>
    %c0_9 = arith.constant 0 : index
    %c0_10 = arith.constant 0 : index
    %c0_11 = arith.constant 0 : index
    %40 = vector.load %arg6[%c0_9, %c0_10, %c0_11] : memref<3x16x384xf32, #tpu.memory_space<vmem>>, vector<1x16x384xf32>
    %41 = vector.shape_cast %40 : vector<1x16x384xf32> to vector<16x384xf32>
    %42 = vector.shape_cast %19 : vector<16x384xf32> to vector<1x16x384xf32>
    tpu.vector_store %arg6[%c0_9, %c0_10, %c0_11], %42 {strides = array<i32>} : memref<3x16x384xf32, #tpu.memory_space<vmem>>, vector<1x16x384xf32>,
    %c1 = arith.constant 1 : index
    %c0_12 = arith.constant 0 : index
    %c0_13 = arith.constant 0 : index
    %43 = vector.load %arg6[%c1, %c0_12, %c0_13] : memref<3x16x384xf32, #tpu.memory_space<vmem>>, vector<1x16x384xf32>
    %44 = vector.shape_cast %43 : vector<1x16x384xf32> to vector<16x384xf32>
    %45 = vector.shape_cast %29 : vector<16x384xf32> to vector<1x16x384xf32>
    tpu.vector_store %arg6[%c1, %c0_12, %c0_13], %45 {strides = array<i32>} : memref<3x16x384xf32, #tpu.memory_space<vmem>>, vector<1x16x384xf32>,
    %c2 = arith.constant 2 : index
    %c0_14 = arith.constant 0 : index
    %c0_15 = arith.constant 0 : index
    %46 = vector.load %arg6[%c2, %c0_14, %c0_15] : memref<3x16x384xf32, #tpu.memory_space<vmem>>, vector<1x16x384xf32>
    %47 = vector.shape_cast %46 : vector<1x16x384xf32> to vector<16x384xf32>
    %48 = vector.shape_cast %39 : vector<16x384xf32> to vector<1x16x384xf32>
    tpu.vector_store %arg6[%c2, %c0_14, %c0_15], %48 {strides = array<i32>} : memref<3x16x384xf32, #tpu.memory_space<vmem>>, vector<1x16x384xf32>,
    return
  }
  func.func @transform_0(%arg0: i32, %arg1: i32) -> (i32, i32) {
    %c0_i32 = arith.constant 0 : i32
    %c0_i32_0 = arith.constant 0 : i32
    return %arg1, %c0_i32 : i32, i32
  }
  func.func @transform_1(%arg0: i32, %arg1: i32) -> (i32, i32, i32) {
    %c0_i32 = arith.constant 0 : i32
    %c0_i32_0 = arith.constant 0 : i32
    %c0_i32_1 = arith.constant 0 : i32
    return %arg1, %c0_i32, %c0_i32_0 : i32, i32, i32
  }
  func.func @transform_2(%arg0: i32, %arg1: i32) -> (i32, i32) {
    %c0_i32 = arith.constant 0 : i32
    %c0_i32_0 = arith.constant 0 : i32
    return %c0_i32, %arg0 : i32, i32
  }
  func.func @transform_3(%arg0: i32, %arg1: i32) -> (i32, i32) {
    %c0_i32 = arith.constant 0 : i32
    %c0_i32_0 = arith.constant 0 : i32
    return %c0_i32, %arg0 : i32, i32
  }
  func.func @transform_4(%arg0: i32, %arg1: i32) -> (i32, i32, i32) {
    %c0_i32 = arith.constant 0 : i32
    %c0_i32_0 = arith.constant 0 : i32
    return %c0_i32, %arg1, %arg0 : i32, i32, i32
  }
}

</mosaic_0001>

<llo_original>
// kernel: tpu_custom_call.1
$region0: #{tpu_custom_call.1}
  #allocation0 [shape = 'u32[]', space=smem, size = 0x4, offset = 0x4, fixed_abs, tag = 'smem constant byte address 0x4 - core index']
  #allocation1 [shape = 'u32[72,128]{1,0:T(1,128)}', space=vmem, size = 0x9000, scoped, tag = 'internal scratch']
  %s0 = inlined_call_operand.vmem [shape: bf16[16,224], index: 0, kind: input, shape index: {}]
  %s1 = inlined_call_operand.vmem [shape: bf16[1,192,32], index: 1, kind: input, shape index: {}]
  %s2 = inlined_call_operand.hbm [shape: bf16[224,1152], index: 2, kind: input, shape index: {}]
  %s3 = inlined_call_operand.vmem [shape: bf16[32,384], index: 3, kind: input, shape index: {}]
  %s4 = inlined_call_operand.hbm [shape: f32[3,16,384], index: 4, kind: output, shape index: {}]
  %s5 = sld [smem:[#allocation0]]
  $region30: #{tpu_custom_call.1} parent=0
    _
  %s7 = ssub.s32 1, %s5
  %s8 = scalar_select 0, %s7, %s5
  $region1: #{tpu_custom_call.1} parent=0
    #allocation2 [shape = 'u8[516096]{0}', space=vmem, size = 0x7e000, scoped, tag = 'input window, operand 2, single buffered']
    #allocation3 [shape = 's32[1]{0}', space=sflag, size = 0x4, scoped, tag = 'scoped memory for tpu_custom_call.1']
    #allocation4 [shape = 's32[1]{0}', space=sflag, size = 0x4, scoped, tag = 'scoped memory for tpu_custom_call.1']
    #allocation5 [shape = 'u8[73728]{0}', space=vmem, size = 0x12000, scoped, tag = 'output window, operand 0, single buffered']
    %9 = vsyncpa [#allocation3], 0
    %10 = vsyncpa [#allocation4], 0
    // Predicated region
    $region2: #{tpu_custom_call.1} parent=1 // pred_check
      _
    $region3: #{tpu_custom_call.1} parent=1 // pred_check_branch
      %12 = sbr.rel (0) target = $region5
    $region4: #{tpu_custom_call.1} parent=1 // pred_region
      _
    $region5: #{tpu_custom_call.1} parent=1 // pred_fallthru
      _
    // Predicated region
    $region6: #{tpu_custom_call.1} parent=1 // pred_check
      _
    $region7: #{tpu_custom_call.1} parent=1 // pred_check_branch
      %14 = sbr.rel (0) target = $region9
    $region8: #{tpu_custom_call.1} parent=1 // pred_region
      _
    $region9: #{tpu_custom_call.1} parent=1 // pred_fallthru
      _
    // Predicated region
    $region10: #{tpu_custom_call.1} parent=1 // pred_check
      _
    $region11: #{tpu_custom_call.1} parent=1 // pred_check_branch
      %16 = sbr.rel (0) target = $region13
    $region12: #{tpu_custom_call.1} parent=1 // pred_region
      %18 = vsyncadd [#allocation3], 0
      %s19 = sshll.u32 %s2, 4
      %s20 = int_to_ptr.hbm [resolvable:$true] %s19
      %s21 = sshll.u32 [#allocation2], 4
      %s22 = int_to_ptr.vmem [resolvable:$true] %s21
      %27 = dma.hbm_to_vmem [thread:$0]  %s20, 16128, %s22, [#allocation3], 576, 576, 36
    $region13: #{tpu_custom_call.1} parent=1 // pred_fallthru
      _
    // Predicated region
    $region14: #{tpu_custom_call.1} parent=1 // pred_check
      _
    $region15: #{tpu_custom_call.1} parent=1 // pred_check_branch
      %29 = sbr.rel (0) target = $region17
    $region16: #{tpu_custom_call.1} parent=1 // pred_region
      _
    $region17: #{tpu_custom_call.1} parent=1 // pred_fallthru
      _
    // Predicated region
    $region18: #{tpu_custom_call.1} parent=1 // pred_check
      _
    $region19: #{tpu_custom_call.1} parent=1 // pred_check_branch
      %31 = sbr.rel (0) target = $region21
    $region20: #{tpu_custom_call.1} parent=1 // pred_region
      %33 = dma.done [#allocation3], 16128
    $region21: #{tpu_custom_call.1} parent=1 // pred_fallthru
      _
    %v35 = vld [vmem:[%s0] sm:$0xff]
    %v36 = vld [vmem:[%s0 + $0x8] sm:$0xff]
    %v37 = vld [vmem:[#allocation2] sm:$0xff]
    %v38 = vld [vmem:[#allocation2 + $0x8] sm:$0xff]
    %v39 = vld [vmem:[#allocation2 + $0x10] sm:$0xff]
    %v40 = vld [vmem:[#allocation2 + $0x18] sm:$0xff]
    %v41 = vld [vmem:[#allocation2 + $0x20] sm:$0xf]
    %v42 = vld [vmem:[#allocation2 + $0x24] sm:$0xff]
    %v43 = vld [vmem:[#allocation2 + $0x2c] sm:$0xff]
    %v44 = vld [vmem:[#allocation2 + $0x34] sm:$0xff]
    %v45 = vld [vmem:[#allocation2 + $0x3c] sm:$0xff]
    %v46 = vld [vmem:[#allocation2 + $0x44] sm:$0xf]
    %v47 = vld [vmem:[#allocation2 + $0x48] sm:$0xff]
    %v48 = vld [vmem:[#allocation2 + $0x50] sm:$0xff]
    %v49 = vld [vmem:[#allocation2 + $0x58] sm:$0xff]
    %v50 = vld [vmem:[#allocation2 + $0x60] sm:$0xff]
    %v51 = vld [vmem:[#allocation2 + $0x68] sm:$0xf]
    %v52 = vld [vmem:[#allocation2 + $0x6c] sm:$0xff]
    %v53 = vld [vmem:[#allocation2 + $0x74] sm:$0xff]
    %v54 = vld [vmem:[#allocation2 + $0x7c] sm:$0xff]
    %v55 = vld [vmem:[#allocation2 + $0x84] sm:$0xff]
    %v56 = vld [vmem:[#allocation2 + $0x8c] sm:$0xf]
    %v57 = vld [vmem:[#allocation2 + $0x90] sm:$0xff]
    %v58 = vld [vmem:[#allocation2 + $0x98] sm:$0xff]
    %v59 = vld [vmem:[#allocation2 + $0xa0] sm:$0xff]
    %v60 = vld [vmem:[#allocation2 + $0xa8] sm:$0xff]
    %v61 = vld [vmem:[#allocation2 + $0xb0] sm:$0xf]
    %v62 = vld [vmem:[#allocation2 + $0xb4] sm:$0xff]
    %v63 = vld [vmem:[#allocation2 + $0xbc] sm:$0xff]
    %v64 = vld [vmem:[#allocation2 + $0xc4] sm:$0xff]
    %v65 = vld [vmem:[#allocation2 + $0xcc] sm:$0xff]
    %v66 = vld [vmem:[#allocation2 + $0xd4] sm:$0xf]
    %v67 = vld [vmem:[#allocation2 + $0xd8] sm:$0xff]
    %v68 = vld [vmem:[#allocation2 + $0xe0] sm:$0xff]
    %v69 = vld [vmem:[#allocation2 + $0xe8] sm:$0xff]
    %v70 = vld [vmem:[#allocation2 + $0xf0] sm:$0xff]
    %v71 = vld [vmem:[#allocation2 + $0xf8] sm:$0xf]
    %v72 = vld [vmem:[#allocation2 + $0xfc] sm:$0xff]
    %v73 = vld [vmem:[#allocation2 + $0x104] sm:$0xff]
    %v74 = vld [vmem:[#allocation2 + $0x10c] sm:$0xff]
    %v75 = vld [vmem:[#allocation2 + $0x114] sm:$0xff]
    %v76 = vld [vmem:[#allocation2 + $0x11c] sm:$0xf]
    %v77 = vld [vmem:[#allocation2 + $0x120] sm:$0xff]
    %v78 = vld [vmem:[#allocation2 + $0x128] sm:$0xff]
    %v79 = vld [vmem:[#allocation2 + $0x130] sm:$0xff]
    %v80 = vld [vmem:[#allocation2 + $0x138] sm:$0xff]
    %v81 = vld [vmem:[#allocation2 + $0x140] sm:$0xf]
    %v82 = vld [vmem:[#allocation2 + $0x144] sm:$0xff]
    %v83 = vld [vmem:[#allocation2 + $0x14c] sm:$0xff]
    %v84 = vld [vmem:[#allocation2 + $0x154] sm:$0xff]
    %v85 = vld [vmem:[#allocation2 + $0x15c] sm:$0xff]
    %v86 = vld [vmem:[#allocation2 + $0x164] sm:$0xf]
    %v87 = vld [vmem:[#allocation2 + $0x168] sm:$0xff]
    %v88 = vld [vmem:[#allocation2 + $0x170] sm:$0xff]
    %v89 = vld [vmem:[#allocation2 + $0x178] sm:$0xff]
    %v90 = vld [vmem:[#allocation2 + $0x180] sm:$0xff]
    %v91 = vld [vmem:[#allocation2 + $0x188] sm:$0xf]
    %v92 = vld [vmem:[#allocation2 + $0x18c] sm:$0xff]
    %v93 = vld [vmem:[#allocation2 + $0x194] sm:$0xff]
    %v94 = vld [vmem:[#allocation2 + $0x19c] sm:$0xff]
    %v95 = vld [vmem:[#allocation2 + $0x1a4] sm:$0xff]
    %v96 = vld [vmem:[#allocation2 + $0x1ac] sm:$0xf]
    %v97 = vld [vmem:[#allocation2 + $0x1b0] sm:$0xff]
    %v98 = vld [vmem:[#allocation2 + $0x1b8] sm:$0xff]
    %v99 = vld [vmem:[#allocation2 + $0x1c0] sm:$0xff]
    %v100 = vld [vmem:[#allocation2 + $0x1c8] sm:$0xff]
    %v101 = vld [vmem:[#allocation2 + $0x1d0] sm:$0xf]
    %v102 = vld [vmem:[#allocation2 + $0x1d4] sm:$0xff]
    %v103 = vld [vmem:[#allocation2 + $0x1dc] sm:$0xff]
    %v104 = vld [vmem:[#allocation2 + $0x1e4] sm:$0xff]
    %v105 = vld [vmem:[#allocation2 + $0x1ec] sm:$0xff]
    %v106 = vld [vmem:[#allocation2 + $0x1f4] sm:$0xf]
    %v107 = vld [vmem:[#allocation2 + $0x1f8] sm:$0xff]
    %v108 = vld [vmem:[#allocation2 + $0x200] sm:$0xff]
    %v109 = vld [vmem:[#allocation2 + $0x208] sm:$0xff]
    %v110 = vld [vmem:[#allocation2 + $0x210] sm:$0xff]
    %v111 = vld [vmem:[#allocation2 + $0x218] sm:$0xf]
    %v112 = vld [vmem:[#allocation2 + $0x21c] sm:$0xff]
    %v113 = vld [vmem:[#allocation2 + $0x224] sm:$0xff]
    %v114 = vld [vmem:[#allocation2 + $0x22c] sm:$0xff]
    %v115 = vld [vmem:[#allocation2 + $0x234] sm:$0xff]
    %v116 = vld [vmem:[#allocation2 + $0x23c] sm:$0xf]
    %v117 = vld [vmem:[#allocation2 + $0x240] sm:$0xff]
    %v118 = vld [vmem:[#allocation2 + $0x248] sm:$0xff]
    %v119 = vld [vmem:[#allocation2 + $0x250] sm:$0xff]
    %v120 = vld [vmem:[#allocation2 + $0x258] sm:$0xff]
    %v121 = vld [vmem:[#allocation2 + $0x260] sm:$0xf]
    %v122 = vld [vmem:[#allocation2 + $0x264] sm:$0xff]
    %v123 = vld [vmem:[#allocation2 + $0x26c] sm:$0xff]
    %v124 = vld [vmem:[#allocation2 + $0x274] sm:$0xff]
    %v125 = vld [vmem:[#allocation2 + $0x27c] sm:$0xff]
    %v126 = vld [vmem:[#allocation2 + $0x284] sm:$0xf]
    %v127 = vld [vmem:[#allocation2 + $0x288] sm:$0xff]
    %v128 = vld [vmem:[#allocation2 + $0x290] sm:$0xff]
    %v129 = vld [vmem:[#allocation2 + $0x298] sm:$0xff]
    %v130 = vld [vmem:[#allocation2 + $0x2a0] sm:$0xff]
    %v131 = vld [vmem:[#allocation2 + $0x2a8] sm:$0xf]
    %v132 = vld [vmem:[#allocation2 + $0x2ac] sm:$0xff]
    %v133 = vld [vmem:[#allocation2 + $0x2b4] sm:$0xff]
    %v134 = vld [vmem:[#allocation2 + $0x2bc] sm:$0xff]
    %v135 = vld [vmem:[#allocation2 + $0x2c4] sm:$0xff]
    %v136 = vld [vmem:[#allocation2 + $0x2cc] sm:$0xf]
    %v137 = vld [vmem:[#allocation2 + $0x2d0] sm:$0xff]
    %v138 = vld [vmem:[#allocation2 + $0x2d8] sm:$0xff]
    %v139 = vld [vmem:[#allocation2 + $0x2e0] sm:$0xff]
    %v140 = vld [vmem:[#allocation2 + $0x2e8] sm:$0xff]
    %v141 = vld [vmem:[#allocation2 + $0x2f0] sm:$0xf]
    %v142 = vld [vmem:[#allocation2 + $0x2f4] sm:$0xff]
    %v143 = vld [vmem:[#allocation2 + $0x2fc] sm:$0xff]
    %v144 = vld [vmem:[#allocation2 + $0x304] sm:$0xff]
    %v145 = vld [vmem:[#allocation2 + $0x30c] sm:$0xff]
    %v146 = vld [vmem:[#allocation2 + $0x314] sm:$0xf]
    %v147 = vld [vmem:[#allocation2 + $0x318] sm:$0xff]
    %v148 = vld [vmem:[#allocation2 + $0x320] sm:$0xff]
    %v149 = vld [vmem:[#allocation2 + $0x328] sm:$0xff]
    %v150 = vld [vmem:[#allocation2 + $0x330] sm:$0xff]
    %v151 = vld [vmem:[#allocation2 + $0x338] sm:$0xf]
    %v152 = vld [vmem:[#allocation2 + $0x33c] sm:$0xff]
    %v153 = vld [vmem:[#allocation2 + $0x344] sm:$0xff]
    %v154 = vld [vmem:[#allocation2 + $0x34c] sm:$0xff]
    %v155 = vld [vmem:[#allocation2 + $0x354] sm:$0xff]
    %v156 = vld [vmem:[#allocation2 + $0x35c] sm:$0xf]
    %v157 = vld [vmem:[#allocation2 + $0x360] sm:$0xff]
    %v158 = vld [vmem:[#allocation2 + $0x368] sm:$0xff]
    %v159 = vld [vmem:[#allocation2 + $0x370] sm:$0xff]
    %v160 = vld [vmem:[#allocation2 + $0x378] sm:$0xff]
    %v161 = vld [vmem:[#allocation2 + $0x380] sm:$0xf]
    %v162 = vld [vmem:[#allocation2 + $0x384] sm:$0xff]
    %v163 = vld [vmem:[#allocation2 + $0x38c] sm:$0xff]
    %v164 = vld [vmem:[#allocation2 + $0x394] sm:$0xff]
    %v165 = vld [vmem:[#allocation2 + $0x39c] sm:$0xff]
    %v166 = vld [vmem:[#allocation2 + $0x3a4] sm:$0xf]
    %v167 = vld [vmem:[#allocation2 + $0x3a8] sm:$0xff]
    %v168 = vld [vmem:[#allocation2 + $0x3b0] sm:$0xff]
    %v169 = vld [vmem:[#allocation2 + $0x3b8] sm:$0xff]
    %v170 = vld [vmem:[#allocation2 + $0x3c0] sm:$0xff]
    %v171 = vld [vmem:[#allocation2 + $0x3c8] sm:$0xf]
    %v172 = vld [vmem:[#allocation2 + $0x3cc] sm:$0xff]
    %v173 = vld [vmem:[#allocation2 + $0x3d4] sm:$0xff]
    %v174 = vld [vmem:[#allocation2 + $0x3dc] sm:$0xff]
    %v175 = vld [vmem:[#allocation2 + $0x3e4] sm:$0xff]
    %v176 = vld [vmem:[#allocation2 + $0x3ec] sm:$0xf]
    %v179 = vunpack.c.l.b16 %v35
    %v180 = vunpack.c.h.b16 %v35
    %v181 = vunpack.c.l.b16 %v36
    %v182 = vunpack.c.h.b16 %v36
    %v183 = vpack.c.b16 %v181, %v179
    %v184 = vpack.c.b16 %v182, %v180
    %v326 = vunpack.c.l.b16 %v37
    %v327 = vunpack.c.h.b16 %v37
    %v328 = vunpack.c.l.b16 %v38
    %v329 = vunpack.c.h.b16 %v38
    %v330 = vunpack.c.l.b16 %v39
    %v331 = vunpack.c.h.b16 %v39
    %v332 = vunpack.c.l.b16 %v40
    %v333 = vunpack.c.h.b16 %v40
    %v334 = vunpack.c.l.b16 %v41
    %v335 = vunpack.c.l.b16 %v42
    %v336 = vunpack.c.h.b16 %v42
    %v337 = vunpack.c.l.b16 %v43
    %v338 = vunpack.c.h.b16 %v43
    %v339 = vunpack.c.l.b16 %v44
    %v340 = vunpack.c.h.b16 %v44
    %v341 = vunpack.c.l.b16 %v45
    %v342 = vunpack.c.h.b16 %v45
    %v343 = vunpack.c.l.b16 %v46
    %v344 = vunpack.c.l.b16 %v47
    %v345 = vunpack.c.h.b16 %v47
    %v346 = vunpack.c.l.b16 %v48
    %v347 = vunpack.c.h.b16 %v48
    %v348 = vunpack.c.l.b16 %v49
    %v349 = vunpack.c.h.b16 %v49
    %v350 = vunpack.c.l.b16 %v50
    %v351 = vunpack.c.h.b16 %v50
    %v352 = vunpack.c.l.b16 %v51
    %v353 = vunpack.c.l.b16 %v52
    %v354 = vunpack.c.h.b16 %v52
    %v355 = vunpack.c.l.b16 %v53
    %v356 = vunpack.c.h.b16 %v53
    %v357 = vunpack.c.l.b16 %v54
    %v358 = vunpack.c.h.b16 %v54
    %v359 = vunpack.c.l.b16 %v55
    %v360 = vunpack.c.h.b16 %v55
    %v361 = vunpack.c.l.b16 %v56
    %v362 = vunpack.c.l.b16 %v57
    %v363 = vunpack.c.h.b16 %v57
    %v364 = vunpack.c.l.b16 %v58
    %v365 = vunpack.c.h.b16 %v58
    %v366 = vunpack.c.l.b16 %v59
    %v367 = vunpack.c.h.b16 %v59
    %v368 = vunpack.c.l.b16 %v60
    %v369 = vunpack.c.h.b16 %v60
    %v370 = vunpack.c.l.b16 %v61
    %v371 = vunpack.c.l.b16 %v62
    %v372 = vunpack.c.h.b16 %v62
    %v373 = vunpack.c.l.b16 %v63
    %v374 = vunpack.c.h.b16 %v63
    %v375 = vunpack.c.l.b16 %v64
    %v376 = vunpack.c.h.b16 %v64
    %v377 = vunpack.c.l.b16 %v65
    %v378 = vunpack.c.h.b16 %v65
    %v379 = vunpack.c.l.b16 %v66
    %v380 = vunpack.c.l.b16 %v67
    %v381 = vunpack.c.h.b16 %v67
    %v382 = vunpack.c.l.b16 %v68
    %v383 = vunpack.c.h.b16 %v68
    %v384 = vunpack.c.l.b16 %v69
    %v385 = vunpack.c.h.b16 %v69
    %v386 = vunpack.c.l.b16 %v70
    %v387 = vunpack.c.h.b16 %v70
    %v388 = vunpack.c.l.b16 %v71
    %v389 = vunpack.c.l.b16 %v72
    %v390 = vunpack.c.h.b16 %v72
    %v391 = vunpack.c.l.b16 %v73
    %v392 = vunpack.c.h.b16 %v73
    %v393 = vunpack.c.l.b16 %v74
    %v394 = vunpack.c.h.b16 %v74
    %v395 = vunpack.c.l.b16 %v75
    %v396 = vunpack.c.h.b16 %v75
    %v397 = vunpack.c.l.b16 %v76
    %v398 = vunpack.c.l.b16 %v77
    %v399 = vunpack.c.h.b16 %v77
    %v400 = vunpack.c.l.b16 %v78
    %v401 = vunpack.c.h.b16 %v78
    %v402 = vunpack.c.l.b16 %v79
    %v403 = vunpack.c.h.b16 %v79
    %v404 = vunpack.c.l.b16 %v80
    %v405 = vunpack.c.h.b16 %v80
    %v406 = vunpack.c.l.b16 %v81
    %v407 = vunpack.c.l.b16 %v82
    %v408 = vunpack.c.h.b16 %v82
    %v409 = vunpack.c.l.b16 %v83
    %v410 = vunpack.c.h.b16 %v83
    %v411 = vunpack.c.l.b16 %v84
    %v412 = vunpack.c.h.b16 %v84
    %v413 = vunpack.c.l.b16 %v85
    %v414 = vunpack.c.h.b16 %v85
    %v415 = vunpack.c.l.b16 %v86
    %v416 = vunpack.c.l.b16 %v87
    %v417 = vunpack.c.h.b16 %v87
    %v418 = vunpack.c.l.b16 %v88
    %v419 = vunpack.c.h.b16 %v88
    %v420 = vunpack.c.l.b16 %v89
    %v421 = vunpack.c.h.b16 %v89
    %v422 = vunpack.c.l.b16 %v90
    %v423 = vunpack.c.h.b16 %v90
    %v424 = vunpack.c.l.b16 %v91
    %v425 = vunpack.c.l.b16 %v92
    %v426 = vunpack.c.h.b16 %v92
    %v427 = vunpack.c.l.b16 %v93
    %v428 = vunpack.c.h.b16 %v93
    %v429 = vunpack.c.l.b16 %v94
    %v430 = vunpack.c.h.b16 %v94
    %v431 = vunpack.c.l.b16 %v95
    %v432 = vunpack.c.h.b16 %v95
    %v433 = vunpack.c.l.b16 %v96
    %v434 = vunpack.c.l.b16 %v97
    %v435 = vunpack.c.h.b16 %v97
    %v436 = vunpack.c.l.b16 %v98
    %v437 = vunpack.c.h.b16 %v98
    %v438 = vunpack.c.l.b16 %v99
    %v439 = vunpack.c.h.b16 %v99
    %v440 = vunpack.c.l.b16 %v100
    %v441 = vunpack.c.h.b16 %v100
    %v442 = vunpack.c.l.b16 %v101
    %v443 = vunpack.c.l.b16 %v102
    %v444 = vunpack.c.h.b16 %v102
    %v445 = vunpack.c.l.b16 %v103
    %v446 = vunpack.c.h.b16 %v103
    %v447 = vunpack.c.l.b16 %v104
    %v448 = vunpack.c.h.b16 %v104
    %v449 = vunpack.c.l.b16 %v105
    %v450 = vunpack.c.h.b16 %v105
    %v451 = vunpack.c.l.b16 %v106
    %v452 = vunpack.c.l.b16 %v107
    %v453 = vunpack.c.h.b16 %v107
    %v454 = vunpack.c.l.b16 %v108
    %v455 = vunpack.c.h.b16 %v108
    %v456 = vunpack.c.l.b16 %v109
    %v457 = vunpack.c.h.b16 %v109
    %v458 = vunpack.c.l.b16 %v110
    %v459 = vunpack.c.h.b16 %v110
    %v460 = vunpack.c.l.b16 %v111
    %v461 = vunpack.c.l.b16 %v112
    %v462 = vunpack.c.h.b16 %v112
    %v463 = vunpack.c.l.b16 %v113
    %v464 = vunpack.c.h.b16 %v113
    %v465 = vunpack.c.l.b16 %v114
    %v466 = vunpack.c.h.b16 %v114
    %v467 = vunpack.c.l.b16 %v115
    %v468 = vunpack.c.h.b16 %v115
    %v469 = vunpack.c.l.b16 %v116
    %v470 = vunpack.c.l.b16 %v117
    %v471 = vunpack.c.h.b16 %v117
    %v472 = vunpack.c.l.b16 %v118
    %v473 = vunpack.c.h.b16 %v118
    %v474 = vunpack.c.l.b16 %v119
    %v475 = vunpack.c.h.b16 %v119
    %v476 = vunpack.c.l.b16 %v120
    %v477 = vunpack.c.h.b16 %v120
    %v478 = vunpack.c.l.b16 %v121
    %v479 = vunpack.c.l.b16 %v122
    %v480 = vunpack.c.h.b16 %v122
    %v481 = vunpack.c.l.b16 %v123
    %v482 = vunpack.c.h.b16 %v123
    %v483 = vunpack.c.l.b16 %v124
    %v484 = vunpack.c.h.b16 %v124
    %v485 = vunpack.c.l.b16 %v125
    %v486 = vunpack.c.h.b16 %v125
    %v487 = vunpack.c.l.b16 %v126
    %v488 = vunpack.c.l.b16 %v127
    %v489 = vunpack.c.h.b16 %v127
    %v490 = vunpack.c.l.b16 %v128
    %v491 = vunpack.c.h.b16 %v128
    %v492 = vunpack.c.l.b16 %v129
    %v493 = vunpack.c.h.b16 %v129
    %v494 = vunpack.c.l.b16 %v130
    %v495 = vunpack.c.h.b16 %v130
    %v496 = vunpack.c.l.b16 %v131
    %v497 = vunpack.c.l.b16 %v132
    %v498 = vunpack.c.h.b16 %v132
    %v499 = vunpack.c.l.b16 %v133
    %v500 = vunpack.c.h.b16 %v133
    %v501 = vunpack.c.l.b16 %v134
    %v502 = vunpack.c.h.b16 %v134
    %v503 = vunpack.c.l.b16 %v135
    %v504 = vunpack.c.h.b16 %v135
    %v505 = vunpack.c.l.b16 %v136
    %v506 = vunpack.c.l.b16 %v137
    %v507 = vunpack.c.h.b16 %v137
    %v508 = vunpack.c.l.b16 %v138
    %v509 = vunpack.c.h.b16 %v138
    %v510 = vunpack.c.l.b16 %v139
    %v511 = vunpack.c.h.b16 %v139
    %v512 = vunpack.c.l.b16 %v140
    %v513 = vunpack.c.h.b16 %v140
    %v514 = vunpack.c.l.b16 %v141
    %v515 = vunpack.c.l.b16 %v142
    %v516 = vunpack.c.h.b16 %v142
    %v517 = vunpack.c.l.b16 %v143
    %v518 = vunpack.c.h.b16 %v143
    %v519 = vunpack.c.l.b16 %v144
    %v520 = vunpack.c.h.b16 %v144
    %v521 = vunpack.c.l.b16 %v145
    %v522 = vunpack.c.h.b16 %v145
    %v523 = vunpack.c.l.b16 %v146
    %v524 = vunpack.c.l.b16 %v147
    %v525 = vunpack.c.h.b16 %v147
    %v526 = vunpack.c.l.b16 %v148
    %v527 = vunpack.c.h.b16 %v148
    %v528 = vunpack.c.l.b16 %v149
    %v529 = vunpack.c.h.b16 %v149
    %v530 = vunpack.c.l.b16 %v150
    %v531 = vunpack.c.h.b16 %v150
    %v532 = vunpack.c.l.b16 %v151
    %v533 = vunpack.c.l.b16 %v152
    %v534 = vunpack.c.h.b16 %v152
    %v535 = vunpack.c.l.b16 %v153
    %v536 = vunpack.c.h.b16 %v153
    %v537 = vunpack.c.l.b16 %v154
    %v538 = vunpack.c.h.b16 %v154
    %v539 = vunpack.c.l.b16 %v155
    %v540 = vunpack.c.h.b16 %v155
    %v541 = vunpack.c.l.b16 %v156
    %v542 = vunpack.c.l.b16 %v157
    %v543 = vunpack.c.h.b16 %v157
    %v544 = vunpack.c.l.b16 %v158
    %v545 = vunpack.c.h.b16 %v158
    %v546 = vunpack.c.l.b16 %v159
    %v547 = vunpack.c.h.b16 %v159
    %v548 = vunpack.c.l.b16 %v160
    %v549 = vunpack.c.h.b16 %v160
    %v550 = vunpack.c.l.b16 %v161
    %v551 = vunpack.c.l.b16 %v162
    %v552 = vunpack.c.h.b16 %v162
    %v553 = vunpack.c.l.b16 %v163
    %v554 = vunpack.c.h.b16 %v163
    %v555 = vunpack.c.l.b16 %v164
    %v556 = vunpack.c.h.b16 %v164
    %v557 = vunpack.c.l.b16 %v165
    %v558 = vunpack.c.h.b16 %v165
    %v559 = vunpack.c.l.b16 %v166
    %v560 = vunpack.c.l.b16 %v167
    %v561 = vunpack.c.h.b16 %v167
    %v562 = vunpack.c.l.b16 %v168
    %v563 = vunpack.c.h.b16 %v168
    %v564 = vunpack.c.l.b16 %v169
    %v565 = vunpack.c.h.b16 %v169
    %v566 = vunpack.c.l.b16 %v170
    %v567 = vunpack.c.h.b16 %v170
    %v568 = vunpack.c.l.b16 %v171
    %v569 = vunpack.c.l.b16 %v172
    %v570 = vunpack.c.h.b16 %v172
    %v571 = vunpack.c.l.b16 %v173
    %v572 = vunpack.c.h.b16 %v173
    %v573 = vunpack.c.l.b16 %v174
    %v574 = vunpack.c.h.b16 %v174
    %v575 = vunpack.c.l.b16 %v175
    %v576 = vunpack.c.h.b16 %v175
    %v577 = vunpack.c.l.b16 %v176
    %v578 = vpack.c.b16 %v335, %v326
    %v579 = vpack.c.b16 %v336, %v327
    %v580 = vpack.c.b16 %v337, %v328
    %v581 = vpack.c.b16 %v338, %v329
    %v582 = vpack.c.b16 %v339, %v330
    %v583 = vpack.c.b16 %v340, %v331
    %v584 = vpack.c.b16 %v341, %v332
    %v585 = vpack.c.b16 %v342, %v333
    %v586 = vpack.c.b16 %v343, %v334
    %v587 = vpack.c.b16 %v353, %v344
    %v588 = vpack.c.b16 %v354, %v345
    %v589 = vpack.c.b16 %v355, %v346
    %v590 = vpack.c.b16 %v356, %v347
    %v591 = vpack.c.b16 %v357, %v348
    %v592 = vpack.c.b16 %v358, %v349
    %v593 = vpack.c.b16 %v359, %v350
    %v594 = vpack.c.b16 %v360, %v351
    %v595 = vpack.c.b16 %v361, %v352
    %v596 = vpack.c.b16 %v371, %v362
    %v597 = vpack.c.b16 %v372, %v363
    %v598 = vpack.c.b16 %v373, %v364
    %v599 = vpack.c.b16 %v374, %v365
    %v600 = vpack.c.b16 %v375, %v366
    %v601 = vpack.c.b16 %v376, %v367
    %v602 = vpack.c.b16 %v377, %v368
    %v603 = vpack.c.b16 %v378, %v369
    %v604 = vpack.c.b16 %v379, %v370
    %v605 = vpack.c.b16 %v389, %v380
    %v606 = vpack.c.b16 %v390, %v381
    %v607 = vpack.c.b16 %v391, %v382
    %v608 = vpack.c.b16 %v392, %v383
    %v609 = vpack.c.b16 %v393, %v384
    %v610 = vpack.c.b16 %v394, %v385
    %v611 = vpack.c.b16 %v395, %v386
    %v612 = vpack.c.b16 %v396, %v387
    %v613 = vpack.c.b16 %v397, %v388
    %v614 = vpack.c.b16 %v407, %v398
    %v615 = vpack.c.b16 %v408, %v399
    %v616 = vpack.c.b16 %v409, %v400
    %v617 = vpack.c.b16 %v410, %v401
    %v618 = vpack.c.b16 %v411, %v402
    %v619 = vpack.c.b16 %v412, %v403
    %v620 = vpack.c.b16 %v413, %v404
    %v621 = vpack.c.b16 %v414, %v405
    %v622 = vpack.c.b16 %v415, %v406
    %v623 = vpack.c.b16 %v425, %v416
    %v624 = vpack.c.b16 %v426, %v417
    %v625 = vpack.c.b16 %v427, %v418
    %v626 = vpack.c.b16 %v428, %v419
    %v627 = vpack.c.b16 %v429, %v420
    %v628 = vpack.c.b16 %v430, %v421
    %v629 = vpack.c.b16 %v431, %v422
    %v630 = vpack.c.b16 %v432, %v423
    %v631 = vpack.c.b16 %v433, %v424
    %v632 = vpack.c.b16 %v443, %v434
    %v633 = vpack.c.b16 %v444, %v435
    %v634 = vpack.c.b16 %v445, %v436
    %v635 = vpack.c.b16 %v446, %v437
    %v636 = vpack.c.b16 %v447, %v438
    %v637 = vpack.c.b16 %v448, %v439
    %v638 = vpack.c.b16 %v449, %v440
    %v639 = vpack.c.b16 %v450, %v441
    %v640 = vpack.c.b16 %v451, %v442
    %v641 = vpack.c.b16 %v461, %v452
    %v642 = vpack.c.b16 %v462, %v453
    %v643 = vpack.c.b16 %v463, %v454
    %v644 = vpack.c.b16 %v464, %v455
    %v645 = vpack.c.b16 %v465, %v456
    %v646 = vpack.c.b16 %v466, %v457
    %v647 = vpack.c.b16 %v467, %v458
    %v648 = vpack.c.b16 %v468, %v459
    %v649 = vpack.c.b16 %v469, %v460
    %v650 = vpack.c.b16 %v479, %v470
    %v651 = vpack.c.b16 %v480, %v471
    %v652 = vpack.c.b16 %v481, %v472
    %v653 = vpack.c.b16 %v482, %v473
    %v654 = vpack.c.b16 %v483, %v474
    %v655 = vpack.c.b16 %v484, %v475
    %v656 = vpack.c.b16 %v485, %v476
    %v657 = vpack.c.b16 %v486, %v477
    %v658 = vpack.c.b16 %v487, %v478
    %v659 = vpack.c.b16 %v497, %v488
    %v660 = vpack.c.b16 %v498, %v489
    %v661 = vpack.c.b16 %v499, %v490
    %v662 = vpack.c.b16 %v500, %v491
    %v663 = vpack.c.b16 %v501, %v492
    %v664 = vpack.c.b16 %v502, %v493
    %v665 = vpack.c.b16 %v503, %v494
    %v666 = vpack.c.b16 %v504, %v495
    %v667 = vpack.c.b16 %v505, %v496
    %v668 = vpack.c.b16 %v515, %v506
    %v669 = vpack.c.b16 %v516, %v507
    %v670 = vpack.c.b16 %v517, %v508
    %v671 = vpack.c.b16 %v518, %v509
    %v672 = vpack.c.b16 %v519, %v510
    %v673 = vpack.c.b16 %v520, %v511
    %v674 = vpack.c.b16 %v521, %v512
    %v675 = vpack.c.b16 %v522, %v513
    %v676 = vpack.c.b16 %v523, %v514
    %v677 = vpack.c.b16 %v533, %v524
    %v678 = vpack.c.b16 %v534, %v525
    %v679 = vpack.c.b16 %v535, %v526
    %v680 = vpack.c.b16 %v536, %v527
    %v681 = vpack.c.b16 %v537, %v528
    %v682 = vpack.c.b16 %v538, %v529
    %v683 = vpack.c.b16 %v539, %v530
    %v684 = vpack.c.b16 %v540, %v531
    %v685 = vpack.c.b16 %v541, %v532
    %v686 = vpack.c.b16 %v551, %v542
    %v687 = vpack.c.b16 %v552, %v543
    %v688 = vpack.c.b16 %v553, %v544
    %v689 = vpack.c.b16 %v554, %v545
    %v690 = vpack.c.b16 %v555, %v546
    %v691 = vpack.c.b16 %v556, %v547
    %v692 = vpack.c.b16 %v557, %v548
    %v693 = vpack.c.b16 %v558, %v549
    %v694 = vpack.c.b16 %v559, %v550
    %v695 = vpack.c.b16 %v569, %v560
    %v696 = vpack.c.b16 %v570, %v561
    %v697 = vpack.c.b16 %v571, %v562
    %v698 = vpack.c.b16 %v572, %v563
    %v699 = vpack.c.b16 %v573, %v564
    %v700 = vpack.c.b16 %v574, %v565
    %v701 = vpack.c.b16 %v575, %v566
    %v702 = vpack.c.b16 %v576, %v567
    %v703 = vpack.c.b16 %v577, %v568
    %vm830 = vcmask 785408
    %v832 = vsel %vm830, %v184, 0
    %834 = vmatpush.bf16.msra.mxu0 %v641
    %835 = vmatpush.bf16.msra.mxu0 %v632
    %836 = vmatpush.bf16.msra.mxu0 %v623
    %837 = vmatpush.bf16.msra.mxu0 %v614
    %838 = vmatpush.bf16.msra.mxu0 %v605
    %839 = vmatpush.bf16.msra.mxu0 %v596
    %840 = vmatpush.bf16.msra.mxu0 %v587
    %841 = vmatpush.bf16.msra.mxu0 %v578
    %842 = vmatmul.bf16.gmra.mxu0 %v183
    %v843 = vpop.f32.mrf.mxu0
    %v844 = vadd.f32 0.0, %v843
    %v845 = vpop.f32.mrf.mxu0
    %v846 = vadd.f32 0.0, %v845
    %847 = vdwg.mxu0
    %848 = vmatpush.bf16.msra.mxu0 0
    %849 = vmatpush.bf16.msra.mxu0 0
    %850 = vmatpush.bf16.msra.mxu0 %v695
    %851 = vmatpush.bf16.msra.mxu0 %v686
    %852 = vmatpush.bf16.msra.mxu0 %v677
    %853 = vmatpush.bf16.msra.mxu0 %v668
    %854 = vmatpush.bf16.msra.mxu0 %v659
    %855 = vmatpush.bf16.msra.mxu0 %v650
    %856 = vmatmul.bf16.gmra.mxu0 %v832
    %v857 = vpop.f32.mrf.mxu0
    %v858 = vadd.f32 %v844, %v857
    %v859 = vpop.f32.mrf.mxu0
    %v860 = vadd.f32 %v846, %v859
    %861 = vdwg.mxu0
    %862 = vmatpush.bf16.msra.mxu0 %v642
    %863 = vmatpush.bf16.msra.mxu0 %v633
    %864 = vmatpush.bf16.msra.mxu0 %v624
    %865 = vmatpush.bf16.msra.mxu0 %v615
    %866 = vmatpush.bf16.msra.mxu0 %v606
    %867 = vmatpush.bf16.msra.mxu0 %v597
    %868 = vmatpush.bf16.msra.mxu0 %v588
    %869 = vmatpush.bf16.msra.mxu0 %v579
    %870 = vmatmul.bf16.gmra.mxu0 %v183
    %v871 = vpop.f32.mrf.mxu0
    %v872 = vadd.f32 0.0, %v871
    %v873 = vpop.f32.mrf.mxu0
    %v874 = vadd.f32 0.0, %v873
    %875 = vdwg.mxu0
    %876 = vmatpush.bf16.msra.mxu0 0
    %877 = vmatpush.bf16.msra.mxu0 0
    %878 = vmatpush.bf16.msra.mxu0 %v696
    %879 = vmatpush.bf16.msra.mxu0 %v687
    %880 = vmatpush.bf16.msra.mxu0 %v678
    %881 = vmatpush.bf16.msra.mxu0 %v669
    %882 = vmatpush.bf16.msra.mxu0 %v660
    %883 = vmatpush.bf16.msra.mxu0 %v651
    %884 = vmatmul.bf16.gmra.mxu0 %v832
    %v885 = vpop.f32.mrf.mxu0
    %v886 = vadd.f32 %v872, %v885
    %v887 = vpop.f32.mrf.mxu0
    %v888 = vadd.f32 %v874, %v887
    %889 = vdwg.mxu0
    %890 = vmatpush.bf16.msra.mxu0 %v643
    %891 = vmatpush.bf16.msra.mxu0 %v634
    %892 = vmatpush.bf16.msra.mxu0 %v625
    %893 = vmatpush.bf16.msra.mxu0 %v616
    %894 = vmatpush.bf16.msra.mxu0 %v607
    %895 = vmatpush.bf16.msra.mxu0 %v598
    %896 = vmatpush.bf16.msra.mxu0 %v589
    %897 = vmatpush.bf16.msra.mxu0 %v580
    %898 = vmatmul.bf16.gmra.mxu0 %v183
    %v899 = vpop.f32.mrf.mxu0
    %v900 = vadd.f32 0.0, %v899
    %v901 = vpop.f32.mrf.mxu0
    %v902 = vadd.f32 0.0, %v901
    %903 = vdwg.mxu0
    %904 = vmatpush.bf16.msra.mxu0 0
    %905 = vmatpush.bf16.msra.mxu0 0
    %906 = vmatpush.bf16.msra.mxu0 %v697
    %907 = vmatpush.bf16.msra.mxu0 %v688
    %908 = vmatpush.bf16.msra.mxu0 %v679
    %909 = vmatpush.bf16.msra.mxu0 %v670
    %910 = vmatpush.bf16.msra.mxu0 %v661
    %911 = vmatpush.bf16.msra.mxu0 %v652
    %912 = vmatmul.bf16.gmra.mxu0 %v832
    %v913 = vpop.f32.mrf.mxu0
    %v914 = vadd.f32 %v900, %v913
    %v915 = vpop.f32.mrf.mxu0
    %v916 = vadd.f32 %v902, %v915
    %917 = vdwg.mxu0
    %918 = vmatpush.bf16.msra.mxu0 %v644
    %919 = vmatpush.bf16.msra.mxu0 %v635
    %920 = vmatpush.bf16.msra.mxu0 %v626
    %921 = vmatpush.bf16.msra.mxu0 %v617
    %922 = vmatpush.bf16.msra.mxu0 %v608
    %923 = vmatpush.bf16.msra.mxu0 %v599
    %924 = vmatpush.bf16.msra.mxu0 %v590
    %925 = vmatpush.bf16.msra.mxu0 %v581
    %926 = vmatmul.bf16.gmra.mxu0 %v183
    %v927 = vpop.f32.mrf.mxu0
    %v928 = vadd.f32 0.0, %v927
    %v929 = vpop.f32.mrf.mxu0
    %v930 = vadd.f32 0.0, %v929
    %931 = vdwg.mxu0
    %932 = vmatpush.bf16.msra.mxu0 0
    %933 = vmatpush.bf16.msra.mxu0 0
    %934 = vmatpush.bf16.msra.mxu0 %v698
    %935 = vmatpush.bf16.msra.mxu0 %v689
    %936 = vmatpush.bf16.msra.mxu0 %v680
    %937 = vmatpush.bf16.msra.mxu0 %v671
    %938 = vmatpush.bf16.msra.mxu0 %v662
    %939 = vmatpush.bf16.msra.mxu0 %v653
    %940 = vmatmul.bf16.gmra.mxu0 %v832
    %v941 = vpop.f32.mrf.mxu0
    %v942 = vadd.f32 %v928, %v941
    %v943 = vpop.f32.mrf.mxu0
    %v944 = vadd.f32 %v930, %v943
    %945 = vdwg.mxu0
    %946 = vmatpush.bf16.msra.mxu0 %v645
    %947 = vmatpush.bf16.msra.mxu0 %v636
    %948 = vmatpush.bf16.msra.mxu0 %v627
    %949 = vmatpush.bf16.msra.mxu0 %v618
    %950 = vmatpush.bf16.msra.mxu0 %v609
    %951 = vmatpush.bf16.msra.mxu0 %v600
    %952 = vmatpush.bf16.msra.mxu0 %v591
    %953 = vmatpush.bf16.msra.mxu0 %v582
    %954 = vmatmul.bf16.gmra.mxu0 %v183
    %v955 = vpop.f32.mrf.mxu0
    %v956 = vadd.f32 0.0, %v955
    %v957 = vpop.f32.mrf.mxu0
    %v958 = vadd.f32 0.0, %v957
    %959 = vdwg.mxu0
    %960 = vmatpush.bf16.msra.mxu0 0
    %961 = vmatpush.bf16.msra.mxu0 0
    %962 = vmatpush.bf16.msra.mxu0 %v699
    %963 = vmatpush.bf16.msra.mxu0 %v690
    %964 = vmatpush.bf16.msra.mxu0 %v681
    %965 = vmatpush.bf16.msra.mxu0 %v672
    %966 = vmatpush.bf16.msra.mxu0 %v663
    %967 = vmatpush.bf16.msra.mxu0 %v654
    %968 = vmatmul.bf16.gmra.mxu0 %v832
    %v969 = vpop.f32.mrf.mxu0
    %v970 = vadd.f32 %v956, %v969
    %v971 = vpop.f32.mrf.mxu0
    %v972 = vadd.f32 %v958, %v971
    %973 = vdwg.mxu0
    %974 = vmatpush.bf16.msra.mxu0 %v646
    %975 = vmatpush.bf16.msra.mxu0 %v637
    %976 = vmatpush.bf16.msra.mxu0 %v628
    %977 = vmatpush.bf16.msra.mxu0 %v619
    %978 = vmatpush.bf16.msra.mxu0 %v610
    %979 = vmatpush.bf16.msra.mxu0 %v601
    %980 = vmatpush.bf16.msra.mxu0 %v592
    %981 = vmatpush.bf16.msra.mxu0 %v583
    %982 = vmatmul.bf16.gmra.mxu0 %v183
    %v983 = vpop.f32.mrf.mxu0
    %v984 = vadd.f32 0.0, %v983
    %v985 = vpop.f32.mrf.mxu0
    %v986 = vadd.f32 0.0, %v985
    %987 = vdwg.mxu0
    %988 = vmatpush.bf16.msra.mxu0 0
    %989 = vmatpush.bf16.msra.mxu0 0
    %990 = vmatpush.bf16.msra.mxu0 %v700
    %991 = vmatpush.bf16.msra.mxu0 %v691
    %992 = vmatpush.bf16.msra.mxu0 %v682
    %993 = vmatpush.bf16.msra.mxu0 %v673
    %994 = vmatpush.bf16.msra.mxu0 %v664
    %995 = vmatpush.bf16.msra.mxu0 %v655
    %996 = vmatmul.bf16.gmra.mxu0 %v832
    %v997 = vpop.f32.mrf.mxu0
    %v998 = vadd.f32 %v984, %v997
    %v999 = vpop.f32.mrf.mxu0
    %v1000 = vadd.f32 %v986, %v999
    %1001 = vdwg.mxu0
    %1002 = vmatpush.bf16.msra.mxu0 %v647
    %1003 = vmatpush.bf16.msra.mxu0 %v638
    %1004 = vmatpush.bf16.msra.mxu0 %v629
    %1005 = vmatpush.bf16.msra.mxu0 %v620
    %1006 = vmatpush.bf16.msra.mxu0 %v611
    %1007 = vmatpush.bf16.msra.mxu0 %v602
    %1008 = vmatpush.bf16.msra.mxu0 %v593
    %1009 = vmatpush.bf16.msra.mxu0 %v584
    %1010 = vmatmul.bf16.gmra.mxu0 %v183
    %v1011 = vpop.f32.mrf.mxu0
    %v1012 = vadd.f32 0.0, %v1011
    %v1013 = vpop.f32.mrf.mxu0
    %v1014 = vadd.f32 0.0, %v1013
    %1015 = vdwg.mxu0
    %1016 = vmatpush.bf16.msra.mxu0 0
    %1017 = vmatpush.bf16.msra.mxu0 0
    %1018 = vmatpush.bf16.msra.mxu0 %v701
    %1019 = vmatpush.bf16.msra.mxu0 %v692
    %1020 = vmatpush.bf16.msra.mxu0 %v683
    %1021 = vmatpush.bf16.msra.mxu0 %v674
    %1022 = vmatpush.bf16.msra.mxu0 %v665
    %1023 = vmatpush.bf16.msra.mxu0 %v656
    %1024 = vmatmul.bf16.gmra.mxu0 %v832
    %v1025 = vpop.f32.mrf.mxu0
    %v1026 = vadd.f32 %v1012, %v1025
    %v1027 = vpop.f32.mrf.mxu0
    %v1028 = vadd.f32 %v1014, %v1027
    %1029 = vdwg.mxu0
    %1030 = vmatpush.bf16.msra.mxu0 %v648
    %1031 = vmatpush.bf16.msra.mxu0 %v639
    %1032 = vmatpush.bf16.msra.mxu0 %v630
    %1033 = vmatpush.bf16.msra.mxu0 %v621
    %1034 = vmatpush.bf16.msra.mxu0 %v612
    %1035 = vmatpush.bf16.msra.mxu0 %v603
    %1036 = vmatpush.bf16.msra.mxu0 %v594
    %1037 = vmatpush.bf16.msra.mxu0 %v585
    %1038 = vmatmul.bf16.gmra.mxu0 %v183
    %v1039 = vpop.f32.mrf.mxu0
    %v1040 = vadd.f32 0.0, %v1039
    %v1041 = vpop.f32.mrf.mxu0
    %v1042 = vadd.f32 0.0, %v1041
    %1043 = vdwg.mxu0
    %1044 = vmatpush.bf16.msra.mxu0 0
    %1045 = vmatpush.bf16.msra.mxu0 0
    %1046 = vmatpush.bf16.msra.mxu0 %v702
    %1047 = vmatpush.bf16.msra.mxu0 %v693
    %1048 = vmatpush.bf16.msra.mxu0 %v684
    %1049 = vmatpush.bf16.msra.mxu0 %v675
    %1050 = vmatpush.bf16.msra.mxu0 %v666
    %1051 = vmatpush.bf16.msra.mxu0 %v657
    %1052 = vmatmul.bf16.gmra.mxu0 %v832
    %v1053 = vpop.f32.mrf.mxu0
    %v1054 = vadd.f32 %v1040, %v1053
    %v1055 = vpop.f32.mrf.mxu0
    %v1056 = vadd.f32 %v1042, %v1055
    %1057 = vdwg.mxu0
    %1058 = vmatpush.bf16.msra.mxu0 %v649
    %1059 = vmatpush.bf16.msra.mxu0 %v640
    %1060 = vmatpush.bf16.msra.mxu0 %v631
    %1061 = vmatpush.bf16.msra.mxu0 %v622
    %1062 = vmatpush.bf16.msra.mxu0 %v613
    %1063 = vmatpush.bf16.msra.mxu0 %v604
    %1064 = vmatpush.bf16.msra.mxu0 %v595
    %1065 = vmatpush.bf16.msra.mxu0 %v586
    %1066 = vmatmul.bf16.gmra.mxu0 %v183
    %v1067 = vpop.f32.mrf.mxu0
    %v1068 = vadd.f32 0.0, %v1067
    %v1069 = vpop.f32.mrf.mxu0
    %v1070 = vadd.f32 0.0, %v1069
    %1071 = vdwg.mxu0
    %1072 = vmatpush.bf16.msra.mxu0 0
    %1073 = vmatpush.bf16.msra.mxu0 0
    %1074 = vmatpush.bf16.msra.mxu0 %v703
    %1075 = vmatpush.bf16.msra.mxu0 %v694
    %1076 = vmatpush.bf16.msra.mxu0 %v685
    %1077 = vmatpush.bf16.msra.mxu0 %v676
    %1078 = vmatpush.bf16.msra.mxu0 %v667
    %1079 = vmatpush.bf16.msra.mxu0 %v658
    %1080 = vmatmul.bf16.gmra.mxu0 %v832
    %v1081 = vpop.f32.mrf.mxu0
    %v1082 = vadd.f32 %v1068, %v1081
    %v1083 = vpop.f32.mrf.mxu0
    %v1084 = vadd.f32 %v1070, %v1083
    %1085 = vdwg.mxu0
    %v1086 = vld [vmem:[%s1] sm:$0xf]
    %v1087 = vld [vmem:[%s1 + $0x4] sm:$0xf]
    %v1088 = vld [vmem:[%s1 + $0x8] sm:$0xf]
    %v1089 = vld [vmem:[%s1 + $0xc] sm:$0xf]
    %v1090 = vld [vmem:[%s1 + $0x10] sm:$0xf]
    %v1091 = vld [vmem:[%s1 + $0x14] sm:$0xf]
    %v1092 = vld [vmem:[%s1 + $0x18] sm:$0xf]
    %v1093 = vld [vmem:[%s1 + $0x1c] sm:$0xf]
    %v1094 = vld [vmem:[%s1 + $0x20] sm:$0xf]
    %v1095 = vld [vmem:[%s1 + $0x24] sm:$0xf]
    %v1096 = vld [vmem:[%s1 + $0x28] sm:$0xf]
    %v1097 = vld [vmem:[%s1 + $0x2c] sm:$0xf]
    %v1098 = vld [vmem:[%s1 + $0x30] sm:$0xf]
    %v1099 = vld [vmem:[%s1 + $0x34] sm:$0xf]
    %v1100 = vld [vmem:[%s1 + $0x38] sm:$0xf]
    %v1101 = vld [vmem:[%s1 + $0x3c] sm:$0xf]
    %v1102 = vld [vmem:[%s1 + $0x40] sm:$0xf]
    %v1103 = vld [vmem:[%s1 + $0x44] sm:$0xf]
    %v1104 = vld [vmem:[%s1 + $0x48] sm:$0xf]
    %v1105 = vld [vmem:[%s1 + $0x4c] sm:$0xf]
    %v1106 = vld [vmem:[%s1 + $0x50] sm:$0xf]
    %v1107 = vld [vmem:[%s1 + $0x54] sm:$0xf]
    %v1108 = vld [vmem:[%s1 + $0x58] sm:$0xf]
    %v1109 = vld [vmem:[%s1 + $0x5c] sm:$0xf]
    %v1110 = vld [vmem:[%s3] sm:$0xff]
    %v1111 = vld [vmem:[%s3 + $0x8] sm:$0xf]
    %v1112 = vld [vmem:[%s3 + $0xc] sm:$0xff]
    %v1113 = vld [vmem:[%s3 + $0x14] sm:$0xf]
    %v1114 = vld [vmem:[%s3 + $0x18] sm:$0xff]
    %v1115 = vld [vmem:[%s3 + $0x20] sm:$0xf]
    %v1116 = vld [vmem:[%s3 + $0x24] sm:$0xff]
    %v1117 = vld [vmem:[%s3 + $0x2c] sm:$0xf]
    %v1142 = vunpack.c.l.b16 %v1086
    %v1143 = vunpack.c.l.b16 %v1087
    %v1144 = vunpack.c.l.b16 %v1088
    %v1145 = vunpack.c.l.b16 %v1089
    %v1146 = vunpack.c.l.b16 %v1090
    %v1147 = vunpack.c.l.b16 %v1091
    %v1148 = vunpack.c.l.b16 %v1092
    %v1149 = vunpack.c.l.b16 %v1093
    %v1150 = vunpack.c.l.b16 %v1094
    %v1151 = vunpack.c.l.b16 %v1095
    %v1152 = vunpack.c.l.b16 %v1096
    %v1153 = vunpack.c.l.b16 %v1097
    %v1154 = vunpack.c.l.b16 %v1098
    %v1155 = vunpack.c.l.b16 %v1099
    %v1156 = vunpack.c.l.b16 %v1100
    %v1157 = vunpack.c.l.b16 %v1101
    %v1158 = vunpack.c.l.b16 %v1102
    %v1159 = vunpack.c.l.b16 %v1103
    %v1160 = vunpack.c.l.b16 %v1104
    %v1161 = vunpack.c.l.b16 %v1105
    %v1162 = vunpack.c.l.b16 %v1106
    %v1163 = vunpack.c.l.b16 %v1107
    %v1164 = vunpack.c.l.b16 %v1108
    %v1165 = vunpack.c.l.b16 %v1109
    %v1166 = vpack.c.b16 %v1143, %v1142
    %v1167 = vpack.c.b16 %v1145, %v1144
    %v1168 = vpack.c.b16 %v1147, %v1146
    %v1169 = vpack.c.b16 %v1149, %v1148
    %v1170 = vpack.c.b16 %v1151, %v1150
    %v1171 = vpack.c.b16 %v1153, %v1152
    %v1172 = vpack.c.b16 %v1155, %v1154
    %v1173 = vpack.c.b16 %v1157, %v1156
    %v1174 = vpack.c.b16 %v1159, %v1158
    %v1175 = vpack.c.b16 %v1161, %v1160
    %v1176 = vpack.c.b16 %v1163, %v1162
    %v1177 = vpack.c.b16 %v1165, %v1164
    %v1186 = vunpack.c.l.b16 %v1110
    %v1187 = vunpack.c.h.b16 %v1110
    %v1188 = vunpack.c.l.b16 %v1111
    %v1189 = vunpack.c.l.b16 %v1112
    %v1190 = vunpack.c.h.b16 %v1112
    %v1191 = vunpack.c.l.b16 %v1113
    %v1192 = vunpack.c.l.b16 %v1114
    %v1193 = vunpack.c.h.b16 %v1114
    %v1194 = vunpack.c.l.b16 %v1115
    %v1195 = vunpack.c.l.b16 %v1116
    %v1196 = vunpack.c.h.b16 %v1116
    %v1197 = vunpack.c.l.b16 %v1117
    %v1198 = vpack.c.b16 %v1189, %v1186
    %v1199 = vpack.c.b16 %v1190, %v1187
    %v1200 = vpack.c.b16 %v1191, %v1188
    %v1201 = vpack.c.b16 %v1195, %v1192
    %v1202 = vpack.c.b16 %v1196, %v1193
    %v1203 = vpack.c.b16 %v1197, %v1194
    %vm1210 = vcmask 261120
    %v1212 = vsel %vm1210, %v1166, 0
    %v1215 = vsel %vm1210, %v1167, 0
    %v1218 = vsel %vm1210, %v1168, 0
    %v1221 = vsel %vm1210, %v1169, 0
    %v1224 = vsel %vm1210, %v1170, 0
    %v1227 = vsel %vm1210, %v1171, 0
    %v1230 = vsel %vm1210, %v1172, 0
    %v1233 = vsel %vm1210, %v1173, 0
    %v1236 = vsel %vm1210, %v1174, 0
    %v1239 = vsel %vm1210, %v1175, 0
    %v1242 = vsel %vm1210, %v1176, 0
    %v1245 = vsel %vm1210, %v1177, 0
    %1247 = vmatpush.bf16.msra.mxu0 0
    %1248 = vmatpush.bf16.msra.mxu0 0
    %1249 = vmatpush.bf16.msra.mxu0 0
    %1250 = vmatpush.bf16.msra.mxu0 0
    %1251 = vmatpush.bf16.msra.mxu0 0
    %1252 = vmatpush.bf16.msra.mxu0 0
    %1253 = vmatpush.bf16.msra.mxu0 %v1201
    %1254 = vmatpush.bf16.msra.mxu0 %v1198
    %1255 = vmatmul.bf16.gmra.mxu0 %v1212
    %v1256 = vpop.f32.mrf.mxu0
    %v1257 = vadd.f32 0.0, %v1256
    %v1258 = vpop.f32.mrf.mxu0
    %v1259 = vadd.f32 0.0, %v1258
    %1260 = vmatmul.bf16.gmra.mxu0 %v1215
    %v1261 = vpop.f32.mrf.mxu0
    %v1262 = vadd.f32 0.0, %v1261
    %v1263 = vpop.f32.mrf.mxu0
    %v1264 = vadd.f32 0.0, %v1263
    %1265 = vmatmul.bf16.gmra.mxu0 %v1218
    %v1266 = vpop.f32.mrf.mxu0
    %v1267 = vadd.f32 0.0, %v1266
    %v1268 = vpop.f32.mrf.mxu0
    %v1269 = vadd.f32 0.0, %v1268
    %1270 = vmatmul.bf16.gmra.mxu0 %v1221
    %v1271 = vpop.f32.mrf.mxu0
    %v1272 = vadd.f32 0.0, %v1271
    %v1273 = vpop.f32.mrf.mxu0
    %v1274 = vadd.f32 0.0, %v1273
    %1275 = vmatmul.bf16.gmra.mxu0 %v1224
    %v1276 = vpop.f32.mrf.mxu0
    %v1277 = vadd.f32 0.0, %v1276
    %v1278 = vpop.f32.mrf.mxu0
    %v1279 = vadd.f32 0.0, %v1278
    %1280 = vmatmul.bf16.gmra.mxu0 %v1227
    %v1281 = vpop.f32.mrf.mxu0
    %v1282 = vadd.f32 0.0, %v1281
    %v1283 = vpop.f32.mrf.mxu0
    %v1284 = vadd.f32 0.0, %v1283
    %1285 = vmatmul.bf16.gmra.mxu0 %v1230
    %v1286 = vpop.f32.mrf.mxu0
    %v1287 = vadd.f32 0.0, %v1286
    %v1288 = vpop.f32.mrf.mxu0
    %v1289 = vadd.f32 0.0, %v1288
    %1290 = vmatmul.bf16.gmra.mxu0 %v1233
    %v1291 = vpop.f32.mrf.mxu0
    %v1292 = vadd.f32 0.0, %v1291
    %v1293 = vpop.f32.mrf.mxu0
    %v1294 = vadd.f32 0.0, %v1293
    %1295 = vmatmul.bf16.gmra.mxu0 %v1236
    %v1296 = vpop.f32.mrf.mxu0
    %v1297 = vadd.f32 0.0, %v1296
    %v1298 = vpop.f32.mrf.mxu0
    %v1299 = vadd.f32 0.0, %v1298
    %1300 = vmatmul.bf16.gmra.mxu0 %v1239
    %v1301 = vpop.f32.mrf.mxu0
    %v1302 = vadd.f32 0.0, %v1301
    %v1303 = vpop.f32.mrf.mxu0
    %v1304 = vadd.f32 0.0, %v1303
    %1305 = vmatmul.bf16.gmra.mxu0 %v1242
    %v1306 = vpop.f32.mrf.mxu0
    %v1307 = vadd.f32 0.0, %v1306
    %v1308 = vpop.f32.mrf.mxu0
    %v1309 = vadd.f32 0.0, %v1308
    %1310 = vmatmul.bf16.gmra.mxu0 %v1245
    %v1311 = vpop.f32.mrf.mxu0
    %v1312 = vadd.f32 0.0, %v1311
    %v1313 = vpop.f32.mrf.mxu0
    %v1314 = vadd.f32 0.0, %v1313
    %1315 = vdwg.mxu0
    %1316 = vmatpush.bf16.msra.mxu0 0
    %1317 = vmatpush.bf16.msra.mxu0 0
    %1318 = vmatpush.bf16.msra.mxu0 0
    %1319 = vmatpush.bf16.msra.mxu0 0
    %1320 = vmatpush.bf16.msra.mxu0 0
    %1321 = vmatpush.bf16.msra.mxu0 0
    %1322 = vmatpush.bf16.msra.mxu0 %v1202
    %1323 = vmatpush.bf16.msra.mxu0 %v1199
    %1324 = vmatmul.bf16.gmra.mxu0 %v1212
    %v1325 = vpop.f32.mrf.mxu0
    %v1326 = vadd.f32 0.0, %v1325
    %v1327 = vpop.f32.mrf.mxu0
    %v1328 = vadd.f32 0.0, %v1327
    %1329 = vmatmul.bf16.gmra.mxu0 %v1215
    %v1330 = vpop.f32.mrf.mxu0
    %v1331 = vadd.f32 0.0, %v1330
    %v1332 = vpop.f32.mrf.mxu0
    %v1333 = vadd.f32 0.0, %v1332
    %1334 = vmatmul.bf16.gmra.mxu0 %v1218
    %v1335 = vpop.f32.mrf.mxu0
    %v1336 = vadd.f32 0.0, %v1335
    %v1337 = vpop.f32.mrf.mxu0
    %v1338 = vadd.f32 0.0, %v1337
    %1339 = vmatmul.bf16.gmra.mxu0 %v1221
    %v1340 = vpop.f32.mrf.mxu0
    %v1341 = vadd.f32 0.0, %v1340
    %v1342 = vpop.f32.mrf.mxu0
    %v1343 = vadd.f32 0.0, %v1342
    %1344 = vmatmul.bf16.gmra.mxu0 %v1224
    %v1345 = vpop.f32.mrf.mxu0
    %v1346 = vadd.f32 0.0, %v1345
    %v1347 = vpop.f32.mrf.mxu0
    %v1348 = vadd.f32 0.0, %v1347
    %1349 = vmatmul.bf16.gmra.mxu0 %v1227
    %v1350 = vpop.f32.mrf.mxu0
    %v1351 = vadd.f32 0.0, %v1350
    %v1352 = vpop.f32.mrf.mxu0
    %v1353 = vadd.f32 0.0, %v1352
    %1354 = vmatmul.bf16.gmra.mxu0 %v1230
    %v1355 = vpop.f32.mrf.mxu0
    %v1356 = vadd.f32 0.0, %v1355
    %v1357 = vpop.f32.mrf.mxu0
    %v1358 = vadd.f32 0.0, %v1357
    %1359 = vmatmul.bf16.gmra.mxu0 %v1233
    %v1360 = vpop.f32.mrf.mxu0
    %v1361 = vadd.f32 0.0, %v1360
    %v1362 = vpop.f32.mrf.mxu0
    %v1363 = vadd.f32 0.0, %v1362
    %1364 = vmatmul.bf16.gmra.mxu0 %v1236
    %v1365 = vpop.f32.mrf.mxu0
    %v1366 = vadd.f32 0.0, %v1365
    %v1367 = vpop.f32.mrf.mxu0
    %v1368 = vadd.f32 0.0, %v1367
    %1369 = vmatmul.bf16.gmra.mxu0 %v1239
    %v1370 = vpop.f32.mrf.mxu0
    %v1371 = vadd.f32 0.0, %v1370
    %v1372 = vpop.f32.mrf.mxu0
    %v1373 = vadd.f32 0.0, %v1372
    %1374 = vmatmul.bf16.gmra.mxu0 %v1242
    %v1375 = vpop.f32.mrf.mxu0
    %v1376 = vadd.f32 0.0, %v1375
    %v1377 = vpop.f32.mrf.mxu0
    %v1378 = vadd.f32 0.0, %v1377
    %1379 = vmatmul.bf16.gmra.mxu0 %v1245
    %v1380 = vpop.f32.mrf.mxu0
    %v1381 = vadd.f32 0.0, %v1380
    %v1382 = vpop.f32.mrf.mxu0
    %v1383 = vadd.f32 0.0, %v1382
    %1384 = vdwg.mxu0
    %1385 = vmatpush.bf16.msra.mxu0 0
    %1386 = vmatpush.bf16.msra.mxu0 0
    %1387 = vmatpush.bf16.msra.mxu0 0
    %1388 = vmatpush.bf16.msra.mxu0 0
    %1389 = vmatpush.bf16.msra.mxu0 0
    %1390 = vmatpush.bf16.msra.mxu0 0
    %1391 = vmatpush.bf16.msra.mxu0 %v1203
    %1392 = vmatpush.bf16.msra.mxu0 %v1200
    %1393 = vmatmul.bf16.gmra.mxu0 %v1212
    %v1394 = vpop.f32.mrf.mxu0
    %v1395 = vadd.f32 0.0, %v1394
    %v1396 = vpop.f32.mrf.mxu0
    %v1397 = vadd.f32 0.0, %v1396
    %1398 = vmatmul.bf16.gmra.mxu0 %v1215
    %v1399 = vpop.f32.mrf.mxu0
    %v1400 = vadd.f32 0.0, %v1399
    %v1401 = vpop.f32.mrf.mxu0
    %v1402 = vadd.f32 0.0, %v1401
    %1403 = vmatmul.bf16.gmra.mxu0 %v1218
    %v1404 = vpop.f32.mrf.mxu0
    %v1405 = vadd.f32 0.0, %v1404
    %v1406 = vpop.f32.mrf.mxu0
    %v1407 = vadd.f32 0.0, %v1406
    %1408 = vmatmul.bf16.gmra.mxu0 %v1221
    %v1409 = vpop.f32.mrf.mxu0
    %v1410 = vadd.f32 0.0, %v1409
    %v1411 = vpop.f32.mrf.mxu0
    %v1412 = vadd.f32 0.0, %v1411
    %1413 = vmatmul.bf16.gmra.mxu0 %v1224
    %v1414 = vpop.f32.mrf.mxu0
    %v1415 = vadd.f32 0.0, %v1414
    %v1416 = vpop.f32.mrf.mxu0
    %v1417 = vadd.f32 0.0, %v1416
    %1418 = vmatmul.bf16.gmra.mxu0 %v1227
    %v1419 = vpop.f32.mrf.mxu0
    %v1420 = vadd.f32 0.0, %v1419
    %v1421 = vpop.f32.mrf.mxu0
    %v1422 = vadd.f32 0.0, %v1421
    %1423 = vmatmul.bf16.gmra.mxu0 %v1230
    %v1424 = vpop.f32.mrf.mxu0
    %v1425 = vadd.f32 0.0, %v1424
    %v1426 = vpop.f32.mrf.mxu0
    %v1427 = vadd.f32 0.0, %v1426
    %1428 = vmatmul.bf16.gmra.mxu0 %v1233
    %v1429 = vpop.f32.mrf.mxu0
    %v1430 = vadd.f32 0.0, %v1429
    %v1431 = vpop.f32.mrf.mxu0
    %v1432 = vadd.f32 0.0, %v1431
    %1433 = vmatmul.bf16.gmra.mxu0 %v1236
    %v1434 = vpop.f32.mrf.mxu0
    %v1435 = vadd.f32 0.0, %v1434
    %v1436 = vpop.f32.mrf.mxu0
    %v1437 = vadd.f32 0.0, %v1436
    %1438 = vmatmul.bf16.gmra.mxu0 %v1239
    %v1439 = vpop.f32.mrf.mxu0
    %v1440 = vadd.f32 0.0, %v1439
    %v1441 = vpop.f32.mrf.mxu0
    %v1442 = vadd.f32 0.0, %v1441
    %1443 = vmatmul.bf16.gmra.mxu0 %v1242
    %v1444 = vpop.f32.mrf.mxu0
    %v1445 = vadd.f32 0.0, %v1444
    %v1446 = vpop.f32.mrf.mxu0
    %v1447 = vadd.f32 0.0, %v1446
    %1448 = vmatmul.bf16.gmra.mxu0 %v1245
    %v1449 = vpop.f32.mrf.mxu0
    %v1450 = vadd.f32 0.0, %v1449
    %v1451 = vpop.f32.mrf.mxu0
    %v1452 = vadd.f32 0.0, %v1451
    %1453 = vdwg.mxu0
    %v1454 = vmul.f32 %v1257, %v858
    %v1455 = vmul.f32 %v1326, %v886
    %v1456 = vmul.f32 %v1395, %v914
    %v1457 = vmul.f32 %v1259, %v860
    %v1458 = vmul.f32 %v1328, %v888
    %v1459 = vmul.f32 %v1397, %v916
    %v1460 = vmul.f32 %v1262, %v942
    %v1461 = vmul.f32 %v1331, %v970
    %v1462 = vmul.f32 %v1400, %v998
    %v1463 = vmul.f32 %v1264, %v944
    %v1464 = vmul.f32 %v1333, %v972
    %v1465 = vmul.f32 %v1402, %v1000
    %v1466 = vadd.f32 %v1454, %v1460
    %v1467 = vadd.f32 %v1455, %v1461
    %v1468 = vadd.f32 %v1456, %v1462
    %v1469 = vadd.f32 %v1457, %v1463
    %v1470 = vadd.f32 %v1458, %v1464
    %v1471 = vadd.f32 %v1459, %v1465
    %v1472 = vmul.f32 %v1267, %v1026
    %v1473 = vmul.f32 %v1336, %v1054
    %v1474 = vmul.f32 %v1405, %v1082
    %v1475 = vmul.f32 %v1269, %v1028
    %v1476 = vmul.f32 %v1338, %v1056
    %v1477 = vmul.f32 %v1407, %v1084
    %v1478 = vadd.f32 %v1466, %v1472
    %v1479 = vadd.f32 %v1467, %v1473
    %v1480 = vadd.f32 %v1468, %v1474
    %v1481 = vadd.f32 %v1469, %v1475
    %v1482 = vadd.f32 %v1470, %v1476
    %v1483 = vadd.f32 %v1471, %v1477
    %v1484 = vadd.f32 %v1478, %v1272
    %v1485 = vadd.f32 %v1479, %v1341
    %v1486 = vadd.f32 %v1480, %v1410
    %v1487 = vadd.f32 %v1481, %v1274
    %v1488 = vadd.f32 %v1482, %v1343
    %v1489 = vadd.f32 %v1483, %v1412
    %v1490 = vmul.f32 %v1277, %v858
    %v1491 = vmul.f32 %v1346, %v886
    %v1492 = vmul.f32 %v1415, %v914
    %v1493 = vmul.f32 %v1279, %v860
    %v1494 = vmul.f32 %v1348, %v888
    %v1495 = vmul.f32 %v1417, %v916
    %v1496 = vmul.f32 %v1282, %v942
    %v1497 = vmul.f32 %v1351, %v970
    %v1498 = vmul.f32 %v1420, %v998
    %v1499 = vmul.f32 %v1284, %v944
    %v1500 = vmul.f32 %v1353, %v972
    %v1501 = vmul.f32 %v1422, %v1000
    %v1502 = vadd.f32 %v1490, %v1496
    %v1503 = vadd.f32 %v1491, %v1497
    %v1504 = vadd.f32 %v1492, %v1498
    %v1505 = vadd.f32 %v1493, %v1499
    %v1506 = vadd.f32 %v1494, %v1500
    %v1507 = vadd.f32 %v1495, %v1501
    %v1508 = vmul.f32 %v1287, %v1026
    %v1509 = vmul.f32 %v1356, %v1054
    %v1510 = vmul.f32 %v1425, %v1082
    %v1511 = vmul.f32 %v1289, %v1028
    %v1512 = vmul.f32 %v1358, %v1056
    %v1513 = vmul.f32 %v1427, %v1084
    %v1514 = vadd.f32 %v1502, %v1508
    %v1515 = vadd.f32 %v1503, %v1509
    %v1516 = vadd.f32 %v1504, %v1510
    %v1517 = vadd.f32 %v1505, %v1511
    %v1518 = vadd.f32 %v1506, %v1512
    %v1519 = vadd.f32 %v1507, %v1513
    %v1520 = vadd.f32 %v1514, %v1292
    %v1521 = vadd.f32 %v1515, %v1361
    %v1522 = vadd.f32 %v1516, %v1430
    %v1523 = vadd.f32 %v1517, %v1294
    %v1524 = vadd.f32 %v1518, %v1363
    %v1525 = vadd.f32 %v1519, %v1432
    %v1526 = vmul.f32 %v1297, %v858
    %v1527 = vmul.f32 %v1366, %v886
    %v1528 = vmul.f32 %v1435, %v914
    %v1529 = vmul.f32 %v1299, %v860
    %v1530 = vmul.f32 %v1368, %v888
    %v1531 = vmul.f32 %v1437, %v916
    %v1532 = vmul.f32 %v1302, %v942
    %v1533 = vmul.f32 %v1371, %v970
    %v1534 = vmul.f32 %v1440, %v998
    %v1535 = vmul.f32 %v1304, %v944
    %v1536 = vmul.f32 %v1373, %v972
    %v1537 = vmul.f32 %v1442, %v1000
    %v1538 = vadd.f32 %v1526, %v1532
    %v1539 = vadd.f32 %v1527, %v1533
    %v1540 = vadd.f32 %v1528, %v1534
    %v1541 = vadd.f32 %v1529, %v1535
    %v1542 = vadd.f32 %v1530, %v1536
    %v1543 = vadd.f32 %v1531, %v1537
    %v1544 = vmul.f32 %v1307, %v1026
    %v1545 = vmul.f32 %v1376, %v1054
    %v1546 = vmul.f32 %v1445, %v1082
    %v1547 = vmul.f32 %v1309, %v1028
    %v1548 = vmul.f32 %v1378, %v1056
    %v1549 = vmul.f32 %v1447, %v1084
    %v1550 = vadd.f32 %v1538, %v1544
    %v1551 = vadd.f32 %v1539, %v1545
    %v1552 = vadd.f32 %v1540, %v1546
    %v1553 = vadd.f32 %v1541, %v1547
    %v1554 = vadd.f32 %v1542, %v1548
    %v1555 = vadd.f32 %v1543, %v1549
    %v1556 = vadd.f32 %v1550, %v1312
    %v1557 = vadd.f32 %v1551, %v1381
    %v1558 = vadd.f32 %v1552, %v1450
    %v1559 = vadd.f32 %v1553, %v1314
    %v1560 = vadd.f32 %v1554, %v1383
    %v1561 = vadd.f32 %v1555, %v1452
    %1562 = vst [vmem:[#allocation5] sm:$0xff] %v1484
    %1563 = vst [vmem:[#allocation5 + $0x8] sm:$0xff] %v1485
    %1564 = vst [vmem:[#allocation5 + $0x10] sm:$0xff] %v1486
    %1565 = vst [vmem:[#allocation5 + $0x18] sm:$0xff] %v1487
    %1566 = vst [vmem:[#allocation5 + $0x20] sm:$0xff] %v1488
    %1567 = vst [vmem:[#allocation5 + $0x28] sm:$0xff] %v1489
    %s1568 = scalar_lea.vmem [#allocation5], 48
    %1569 = vst [vmem:[%s1568] sm:$0xff] %v1520
    %1570 = vst [vmem:[%s1568 + $0x8] sm:$0xff] %v1521
    %1571 = vst [vmem:[%s1568 + $0x10] sm:$0xff] %v1522
    %1572 = vst [vmem:[%s1568 + $0x18] sm:$0xff] %v1523
    %1573 = vst [vmem:[%s1568 + $0x20] sm:$0xff] %v1524
    %1574 = vst [vmem:[%s1568 + $0x28] sm:$0xff] %v1525
    %s1575 = scalar_lea.vmem [#allocation5], 96
    %1576 = vst [vmem:[%s1575] sm:$0xff] %v1556
    %1577 = vst [vmem:[%s1575 + $0x8] sm:$0xff] %v1557
    %1578 = vst [vmem:[%s1575 + $0x10] sm:$0xff] %v1558
    %1579 = vst [vmem:[%s1575 + $0x18] sm:$0xff] %v1559
    %1580 = vst [vmem:[%s1575 + $0x20] sm:$0xff] %v1560
    %1581 = vst [vmem:[%s1575 + $0x28] sm:$0xff] %v1561
    // Predicated region
    $region22: #{tpu_custom_call.1} parent=1 // pred_check
      _
    $region23: #{tpu_custom_call.1} parent=1 // pred_check_branch
      %1583 = sbr.rel (0) target = $region25
    $region24: #{tpu_custom_call.1} parent=1 // pred_region
      %1585 = vsyncadd [#allocation4], 0
      %s1586 = sshll.u32 [#allocation5], 4
      %s1587 = int_to_ptr.vmem [resolvable:$true] %s1586
      %s1588 = sshll.u32 %s4, 4
      %s1589 = int_to_ptr.hbm [resolvable:$true] %s1588
      %1594 = dma.vmem_to_hbm [thread:$0]  %s1587, 2304, %s1589, [#allocation4], 384, 384, 24
    $region25: #{tpu_custom_call.1} parent=1 // pred_fallthru
      _
    // Predicated region
    $region26: #{tpu_custom_call.1} parent=1 // pred_check
      _
    $region27: #{tpu_custom_call.1} parent=1 // pred_check_branch
      %1596 = sbr.rel (0) target = $region29
    $region28: #{tpu_custom_call.1} parent=1 // pred_region
      %1598 = dma.done [#allocation4], 2304
    $region29: #{tpu_custom_call.1} parent=1 // pred_fallthru
      _
    %1599 = vsyncpa [#allocation3], 1
    %1600 = vsyncpa [#allocation4], 1

</llo_original>
